<compile_context>
chip_gen: v7x
topology: tpu7x:2x2x1
jax: 0.10.0
libtpu: 0.0.40
codegen_flags: <defaults>
</compile_context>

<pallas_src>
import functools
import math

import jax
import jax.numpy as jnp
from jax import lax
from jax.experimental import pallas as pl
from jax.experimental.pallas import tpu as pltpu


def mha_layer_kernel(x_ref, w_qkv_ref, b_qkv_ref, w_out_ref, b_out_ref, o_ref,
                     *, n_head, head_dim, batch, seq):
    """Whole-batch fused MHA layer (single invocation, no grid).

    x_ref:     (B*S, E)  f32   tokens, batch folded onto the sublane axis
    w_qkv_ref: (E, 3E)   f32   [Wq^T | Wk^T | Wv^T]   (fused QKV projection)
    b_qkv_ref: (1, 3E)   f32   [bq | bk | bv]
    w_out_ref: (E, E)    f32   fused  out_proj^T @ proj^T
    b_out_ref: (1, E)    f32   fused  bo @ proj^T + bp
    o_ref:     (B, S, E)       output
    """
    emb = n_head * head_dim
    scale = 1.0 / math.sqrt(head_dim)

    x = x_ref[...]                                           # (B*S, E), already f32

    # Single wide QKV projection: one (B*S,E)@(E,3E) MXU push (lane width 3E,
    # sublane fill B*S) instead of three (S,E)@(E,E) pushes per batch row.
    qkv = jnp.dot(x, w_qkv_ref[...],
                  preferred_element_type=jnp.float32) + b_qkv_ref[...]   # (B*S, 3E)

    # Causal *float* mask generated in-kernel (1.0 on/below diag, 0.0 above),
    # ADDED to the scores — bit-exact with the torch tril-of-ones buffer and
    # removes one (S,S) input BlockSpec + DMA.
    row = lax.broadcasted_iota(jnp.int32, (seq, seq), 0)
    col = lax.broadcasted_iota(jnp.int32, (seq, seq), 1)
    mask = jnp.where(row >= col, 1.0, 0.0).astype(jnp.float32)           # (S, S)

    w_out = w_out_ref[...]                                   # (E, E)
    b_out = b_out_ref[...]                                   # (1, E)

    # Static unroll over batch rows and heads: lane/sublane slices of the qkv
    # slab (no stack/concatenate relayouts), with the fused output projection
    # folded into the head loop as a row-sliced matmul accumulation.
    for b in range(batch):
        r0 = b * seq
        acc = jnp.zeros((seq, emb), jnp.float32)
        for h in range(n_head):
            c = h * head_dim
            q = qkv[r0:r0 + seq, c:c + head_dim] * scale               # (S, hd)
            k = qkv[r0:r0 + seq, emb + c:emb + c + head_dim]           # (S, hd)
            v = qkv[r0:r0 + seq, 2 * emb + c:2 * emb + c + head_dim]   # (S, hd)

            # scores: q @ k^T without an explicit transpose relayout.
            s = lax.dot_general(q, k, (((1,), (1,)), ((), ())),
                                preferred_element_type=jnp.float32)    # (S, S)
            s = s + mask                       # float tril mask ADDED (faithful)
            s = s - jnp.max(s, axis=-1, keepdims=True)
            p = jnp.exp(s)
            p = p / jnp.sum(p, axis=-1, keepdims=True)                 # exact softmax
            # TODO(synk): attention-weights dropout (attn_pdrop) skipped (eval).

            y_h = jnp.dot(p, v, preferred_element_type=jnp.float32)    # (S, hd)
            # Row-slice of the fused out_proj∘proj weight replaces the head
            # concat and the separate epilogue GEMMs.
            acc = acc + jnp.dot(y_h, w_out[c:c + head_dim, :],
                                preferred_element_type=jnp.float32)    # (S, E)
        # TODO(synk): residual dropout (resid_pdrop) skipped (eval semantics).
        o_ref[b] = (acc + b_out).astype(o_ref.dtype)


def prepare_params(params):
    """One-time parameter preprocessing — hoisted out of the per-call path."""
    f32 = jnp.float32
    E = params["wq"].shape[0]
    # torch Linear computes y = x @ W.T + b, so kernel-side weights are W.T.
    w_qkv = jnp.concatenate(
        [params["wq"].T, params["wk"].T, params["wv"].T], axis=1).astype(f32)   # (E, 3E)
    b_qkv = jnp.concatenate(
        [params["bq"], params["bk"], params["bv"]]).reshape(1, 3 * E).astype(f32)
    # Fuse MultiheadAttention.out_proj followed by self.proj into one Linear
    # (exact in eval mode: no nonlinearity / dropout between them):
    #   (a @ Wo.T + bo) @ Wp.T + bp == a @ (Wo.T @ Wp.T) + (bo @ Wp.T + bp)
    wo_t = params["wo"].astype(f32).T
    wp_t = params["wp"].astype(f32).T
    w_out = jnp.dot(wo_t, wp_t)                                                  # (E, E)
    b_out = (jnp.dot(params["bo"].astype(f32), wp_t)
             + params["bp"].astype(f32)).reshape(1, E)                           # (1, E)
    return {"w_qkv": w_qkv, "b_qkv": b_qkv, "w_out": w_out, "b_out": b_out}


def multihead_attention_layer(x, prepared, *, n_head):
    B, S, E = x.shape
    hd = E // n_head

    # Whole batch in a single invocation (no grid): at B=2, S=8, E=32 the whole
    # problem (~30 KiB resident) fits trivially in VMEM on v5e/v6e/v7x, and
    # folding the batch avoids B-1 serial grid steps (~0.35 us each) plus their
    # DMA-descriptor issue on single-TC chips.  (On v7x one could re-introduce
    # grid=(B,) + "parallel" to shard across the two TensorCores, but at ~1 us
    # of per-core work that mostly duplicates launch/weight-DMA fixed cost.)
    x2d = x.reshape(B * S, E).astype(jnp.float32)
    # TODO(synk): bf16 matmul inputs (keeping f32 accumulation/softmax) would
    # halve DMA bytes / double MXU rate, but is skipped to keep tight f32 parity
    # with the PyTorch reference at these tiny shapes.

    kernel = functools.partial(mha_layer_kernel, n_head=n_head, head_dim=hd,
                               batch=B, seq=S)
    vmem = pl.BlockSpec(memory_space=pltpu.MemorySpace.VMEM)
    return pl.pallas_call(
        kernel,
        out_shape=jax.ShapeDtypeStruct((B, S, E), x.dtype),
        in_specs=[vmem] * 5,
        out_specs=vmem,
    )(x2d, prepared["w_qkv"], prepared["b_qkv"],
      prepared["w_out"], prepared["b_out"])


def reference_forward(x, params, *, n_head):
    """Pure-JAX replica of the PyTorch forward (eval mode), for checking."""
    B, S, E = x.shape
    hd = E // n_head
    scale = 1.0 / math.sqrt(hd)

    def lin(v, w, b):
        return jnp.einsum("bse,oe->bso", v, w) + b

    q = lin(x, params["wq"], params["bq"]).reshape(B, S, n_head, hd).transpose(0, 2, 1, 3)
    k = lin(x, params["wk"], params["bk"]).reshape(B, S, n_head, hd).transpose(0, 2, 1, 3)
    v = lin(x, params["wv"], params["bv"]).reshape(B, S, n_head, hd).transpose(0, 2, 1, 3)

    scores = jnp.einsum("bhqd,bhkd->bhqk", q * scale, k) + params["mask"][:S, :S]
    p = jax.nn.softmax(scores, axis=-1)
    y = jnp.einsum("bhqk,bhkd->bhqd", p, v).transpose(0, 2, 1, 3).reshape(B, S, E)
    y = lin(y, params["wo"], params["bo"])
    y = lin(y, params["wp"], params["bp"])
    return y


if __name__ == "__main__":
    # config: n_embd=32, n_head=4, block_size=8, dropouts=0 (eval)
    B, S, E, H = 2, 8, 32, 4

    key = jax.random.PRNGKey(0)
    keys = jax.random.split(key, 12)

    scale = 0.1
    params = {
        "wq": scale * jax.random.normal(keys[0], (E, E), jnp.float32),
        "wk": scale * jax.random.normal(keys[1], (E, E), jnp.float32),
        "wv": scale * jax.random.normal(keys[2], (E, E), jnp.float32),
        "bq": scale * jax.random.normal(keys[3], (E,), jnp.float32),
        "bk": scale * jax.random.normal(keys[4], (E,), jnp.float32),
        "bv": scale * jax.random.normal(keys[5], (E,), jnp.float32),
        "wo": scale * jax.random.normal(keys[6], (E, E), jnp.float32),
        "bo": scale * jax.random.normal(keys[7], (E,), jnp.float32),
        "wp": scale * jax.random.normal(keys[8], (E, E), jnp.float32),
        "bp": scale * jax.random.normal(keys[9], (E,), jnp.float32),
        "mask": jnp.tril(jnp.ones((S, S), jnp.float32)),
    }
    x = jax.random.normal(keys[10], (B, S, E), jnp.float32)

    # Parameter preprocessing happens ONCE (not per forward call).
    prepared = jax.tree_util.tree_map(jax.block_until_ready, prepare_params(params))

    out = multihead_attention_layer(x, prepared, n_head=H)
    out = jax.block_until_ready(out)

    ref = reference_forward(x, params, n_head=H)
    assert out.shape == (B, S, E)
    # Exact softmax (no approx reciprocal); only numerics delta vs PyTorch-style
    # reference is the fused out_proj∘proj weight composition (f32 reassociation).
    assert jnp.allclose(out, ref, atol=1e-4, rtol=1e-4), (
        f"max abs err = {jnp.max(jnp.abs(out - ref))}"
    )

    print("KERNEL_OK")
</pallas_src>

<mosaic_0001>
module attributes {stable_mosaic.version = 11 : i64} {
  func.func @mha_layer_kernel(%arg0: memref<16x32xf32, #tpu.memory_space<vmem>>, %arg1: memref<32x96xf32, #tpu.memory_space<vmem>>, %arg2: memref<1x96xf32, #tpu.memory_space<vmem>>, %arg3: memref<32x32xf32, #tpu.memory_space<vmem>>, %arg4: memref<1x32xf32, #tpu.memory_space<vmem>>, %arg5: memref<2x8x32xf32, #tpu.memory_space<vmem>>) attributes {dimension_semantics = [], scalar_prefetch = 0 : i64, scratch_operands = 0 : i64, tpu.core_type = #tpu.core_type<tc>} {
    %c0 = arith.constant 0 : index
    %c0_0 = arith.constant 0 : index
    %0 = vector.load %arg0[%c0, %c0_0] : memref<16x32xf32, #tpu.memory_space<vmem>>, vector<16x32xf32>
    %c0_1 = arith.constant 0 : index
    %c0_2 = arith.constant 0 : index
    %1 = vector.load %arg1[%c0_1, %c0_2] : memref<32x96xf32, #tpu.memory_space<vmem>>, vector<32x96xf32>
    %cst = arith.constant dense<0.000000e+00> : vector<16x96xf32>
    %2 = tpu.matmul %0, %1, %cst {dimension_numbers = #tpu.dot_dimension_numbers<[1], [0], [0], [1], [0, 0, 1, 1], [], []>} : vector<16x32xf32>, vector<32x96xf32>, vector<16x96xf32> -> vector<16x96xf32>
    %c0_3 = arith.constant 0 : index
    %c0_4 = arith.constant 0 : index
    %3 = vector.load %arg2[%c0_3, %c0_4] : memref<1x96xf32, #tpu.memory_space<vmem>>, vector<1x96xf32>
    %4 = vector.broadcast %3 : vector<1x96xf32> to vector<16x96xf32>
    %5 = arith.addf %2, %4 : vector<16x96xf32>
    %6 = tpu.iota {dimensions = array<i32: 0>} : vector<8x8xi32>
    %7 = tpu.iota {dimensions = array<i32: 1>} : vector<8x8xi32>
    %8 = arith.cmpi sge, %6, %7 : vector<8x8xi32>
    %cst_5 = arith.constant 1.000000e+00 : f32
    %cst_6 = arith.constant 0.000000e+00 : f32
    %9 = vector.broadcast %cst_5 : f32 to vector<8x8xf32>
    %10 = vector.broadcast %cst_6 : f32 to vector<8x8xf32>
    %11 = arith.select %8, %9, %10 : vector<8x8xi1>, vector<8x8xf32>
    %c0_7 = arith.constant 0 : index
    %c0_8 = arith.constant 0 : index
    %12 = vector.load %arg3[%c0_7, %c0_8] : memref<32x32xf32, #tpu.memory_space<vmem>>, vector<32x32xf32>
    %c0_9 = arith.constant 0 : index
    %c0_10 = arith.constant 0 : index
    %13 = vector.load %arg4[%c0_9, %c0_10] : memref<1x32xf32, #tpu.memory_space<vmem>>, vector<1x32xf32>
    %cst_11 = arith.constant 0.000000e+00 : f32
    %14 = vector.broadcast %cst_11 : f32 to vector<8x32xf32>
    %15 = vector.extract_strided_slice %5 {offsets = [0, 0], sizes = [8, 8], strides = [1, 1]} : vector<16x96xf32> to vector<8x8xf32>
    %cst_12 = arith.constant 0.353553385 : f32
    %16 = vector.broadcast %cst_12 : f32 to vector<8x8xf32>
    %17 = arith.mulf %15, %16 : vector<8x8xf32>
    %18 = vector.extract_strided_slice %5 {offsets = [0, 32], sizes = [8, 8], strides = [1, 1]} : vector<16x96xf32> to vector<8x8xf32>
    %19 = vector.extract_strided_slice %5 {offsets = [0, 64], sizes = [8, 8], strides = [1, 1]} : vector<16x96xf32> to vector<8x8xf32>
    %cst_13 = arith.constant dense<0.000000e+00> : vector<8x8xf32>
    %20 = tpu.matmul %17, %18, %cst_13 {dimension_numbers = #tpu.dot_dimension_numbers<[1], [1], [0], [0], [0, 0, 1, 0], [], []>} : vector<8x8xf32>, vector<8x8xf32>, vector<8x8xf32> -> vector<8x8xf32>
    %21 = arith.addf %20, %11 : vector<8x8xf32>
    %cst_14 = arith.constant dense<0xFF800000> : vector<8xf32>
    %22 = vector.multi_reduction <maximumf>, %21, %cst_14 [1] : vector<8x8xf32> to vector<8xf32>
    %23 = vector.shape_cast %22 : vector<8xf32> to vector<8x1xf32>
    %24 = vector.broadcast %23 : vector<8x1xf32> to vector<8x8xf32>
    %25 = arith.subf %21, %24 : vector<8x8xf32>
    %26 = math.exp %25 : vector<8x8xf32>
    %cst_15 = arith.constant dense<0.000000e+00> : vector<8xf32>
    %27 = vector.multi_reduction <add>, %26, %cst_15 [1] : vector<8x8xf32> to vector<8xf32>
    %28 = vector.shape_cast %27 : vector<8xf32> to vector<8x1xf32>
    %29 = vector.broadcast %28 : vector<8x1xf32> to vector<8x8xf32>
    %30 = arith.divf %26, %29 : vector<8x8xf32>
    %cst_16 = arith.constant dense<0.000000e+00> : vector<8x8xf32>
    %31 = tpu.matmul %30, %19, %cst_16 {dimension_numbers = #tpu.dot_dimension_numbers<[1], [0], [0], [1], [0, 0, 1, 1], [], []>} : vector<8x8xf32>, vector<8x8xf32>, vector<8x8xf32> -> vector<8x8xf32>
    %32 = vector.extract_strided_slice %12 {offsets = [0, 0], sizes = [8, 32], strides = [1, 1]} : vector<32x32xf32> to vector<8x32xf32>
    %cst_17 = arith.constant dense<0.000000e+00> : vector<8x32xf32>
    %33 = tpu.matmul %31, %32, %cst_17 {dimension_numbers = #tpu.dot_dimension_numbers<[1], [0], [0], [1], [0, 0, 1, 1], [], []>} : vector<8x8xf32>, vector<8x32xf32>, vector<8x32xf32> -> vector<8x32xf32>
    %34 = arith.addf %14, %33 : vector<8x32xf32>
    %35 = vector.extract_strided_slice %5 {offsets = [0, 8], sizes = [8, 8], strides = [1, 1]} : vector<16x96xf32> to vector<8x8xf32>
    %cst_18 = arith.constant 0.353553385 : f32
    %36 = vector.broadcast %cst_18 : f32 to vector<8x8xf32>
    %37 = arith.mulf %35, %36 : vector<8x8xf32>
    %38 = vector.extract_strided_slice %5 {offsets = [0, 40], sizes = [8, 8], strides = [1, 1]} : vector<16x96xf32> to vector<8x8xf32>
    %39 = vector.extract_strided_slice %5 {offsets = [0, 72], sizes = [8, 8], strides = [1, 1]} : vector<16x96xf32> to vector<8x8xf32>
    %cst_19 = arith.constant dense<0.000000e+00> : vector<8x8xf32>
    %40 = tpu.matmul %37, %38, %cst_19 {dimension_numbers = #tpu.dot_dimension_numbers<[1], [1], [0], [0], [0, 0, 1, 0], [], []>} : vector<8x8xf32>, vector<8x8xf32>, vector<8x8xf32> -> vector<8x8xf32>
    %41 = arith.addf %40, %11 : vector<8x8xf32>
    %cst_20 = arith.constant dense<0xFF800000> : vector<8xf32>
    %42 = vector.multi_reduction <maximumf>, %41, %cst_20 [1] : vector<8x8xf32> to vector<8xf32>
    %43 = vector.shape_cast %42 : vector<8xf32> to vector<8x1xf32>
    %44 = vector.broadcast %43 : vector<8x1xf32> to vector<8x8xf32>
    %45 = arith.subf %41, %44 : vector<8x8xf32>
    %46 = math.exp %45 : vector<8x8xf32>
    %cst_21 = arith.constant dense<0.000000e+00> : vector<8xf32>
    %47 = vector.multi_reduction <add>, %46, %cst_21 [1] : vector<8x8xf32> to vector<8xf32>
    %48 = vector.shape_cast %47 : vector<8xf32> to vector<8x1xf32>
    %49 = vector.broadcast %48 : vector<8x1xf32> to vector<8x8xf32>
    %50 = arith.divf %46, %49 : vector<8x8xf32>
    %cst_22 = arith.constant dense<0.000000e+00> : vector<8x8xf32>
    %51 = tpu.matmul %50, %39, %cst_22 {dimension_numbers = #tpu.dot_dimension_numbers<[1], [0], [0], [1], [0, 0, 1, 1], [], []>} : vector<8x8xf32>, vector<8x8xf32>, vector<8x8xf32> -> vector<8x8xf32>
    %52 = vector.extract_strided_slice %12 {offsets = [8, 0], sizes = [8, 32], strides = [1, 1]} : vector<32x32xf32> to vector<8x32xf32>
    %cst_23 = arith.constant dense<0.000000e+00> : vector<8x32xf32>
    %53 = tpu.matmul %51, %52, %cst_23 {dimension_numbers = #tpu.dot_dimension_numbers<[1], [0], [0], [1], [0, 0, 1, 1], [], []>} : vector<8x8xf32>, vector<8x32xf32>, vector<8x32xf32> -> vector<8x32xf32>
    %54 = arith.addf %34, %53 : vector<8x32xf32>
    %55 = vector.extract_strided_slice %5 {offsets = [0, 16], sizes = [8, 8], strides = [1, 1]} : vector<16x96xf32> to vector<8x8xf32>
    %cst_24 = arith.constant 0.353553385 : f32
    %56 = vector.broadcast %cst_24 : f32 to vector<8x8xf32>
    %57 = arith.mulf %55, %56 : vector<8x8xf32>
    %58 = vector.extract_strided_slice %5 {offsets = [0, 48], sizes = [8, 8], strides = [1, 1]} : vector<16x96xf32> to vector<8x8xf32>
    %59 = vector.extract_strided_slice %5 {offsets = [0, 80], sizes = [8, 8], strides = [1, 1]} : vector<16x96xf32> to vector<8x8xf32>
    %cst_25 = arith.constant dense<0.000000e+00> : vector<8x8xf32>
    %60 = tpu.matmul %57, %58, %cst_25 {dimension_numbers = #tpu.dot_dimension_numbers<[1], [1], [0], [0], [0, 0, 1, 0], [], []>} : vector<8x8xf32>, vector<8x8xf32>, vector<8x8xf32> -> vector<8x8xf32>
    %61 = arith.addf %60, %11 : vector<8x8xf32>
    %cst_26 = arith.constant dense<0xFF800000> : vector<8xf32>
    %62 = vector.multi_reduction <maximumf>, %61, %cst_26 [1] : vector<8x8xf32> to vector<8xf32>
    %63 = vector.shape_cast %62 : vector<8xf32> to vector<8x1xf32>
    %64 = vector.broadcast %63 : vector<8x1xf32> to vector<8x8xf32>
    %65 = arith.subf %61, %64 : vector<8x8xf32>
    %66 = math.exp %65 : vector<8x8xf32>
    %cst_27 = arith.constant dense<0.000000e+00> : vector<8xf32>
    %67 = vector.multi_reduction <add>, %66, %cst_27 [1] : vector<8x8xf32> to vector<8xf32>
    %68 = vector.shape_cast %67 : vector<8xf32> to vector<8x1xf32>
    %69 = vector.broadcast %68 : vector<8x1xf32> to vector<8x8xf32>
    %70 = arith.divf %66, %69 : vector<8x8xf32>
    %cst_28 = arith.constant dense<0.000000e+00> : vector<8x8xf32>
    %71 = tpu.matmul %70, %59, %cst_28 {dimension_numbers = #tpu.dot_dimension_numbers<[1], [0], [0], [1], [0, 0, 1, 1], [], []>} : vector<8x8xf32>, vector<8x8xf32>, vector<8x8xf32> -> vector<8x8xf32>
    %72 = vector.extract_strided_slice %12 {offsets = [16, 0], sizes = [8, 32], strides = [1, 1]} : vector<32x32xf32> to vector<8x32xf32>
    %cst_29 = arith.constant dense<0.000000e+00> : vector<8x32xf32>
    %73 = tpu.matmul %71, %72, %cst_29 {dimension_numbers = #tpu.dot_dimension_numbers<[1], [0], [0], [1], [0, 0, 1, 1], [], []>} : vector<8x8xf32>, vector<8x32xf32>, vector<8x32xf32> -> vector<8x32xf32>
    %74 = arith.addf %54, %73 : vector<8x32xf32>
    %75 = vector.extract_strided_slice %5 {offsets = [0, 24], sizes = [8, 8], strides = [1, 1]} : vector<16x96xf32> to vector<8x8xf32>
    %cst_30 = arith.constant 0.353553385 : f32
    %76 = vector.broadcast %cst_30 : f32 to vector<8x8xf32>
    %77 = arith.mulf %75, %76 : vector<8x8xf32>
    %78 = vector.extract_strided_slice %5 {offsets = [0, 56], sizes = [8, 8], strides = [1, 1]} : vector<16x96xf32> to vector<8x8xf32>
    %79 = vector.extract_strided_slice %5 {offsets = [0, 88], sizes = [8, 8], strides = [1, 1]} : vector<16x96xf32> to vector<8x8xf32>
    %cst_31 = arith.constant dense<0.000000e+00> : vector<8x8xf32>
    %80 = tpu.matmul %77, %78, %cst_31 {dimension_numbers = #tpu.dot_dimension_numbers<[1], [1], [0], [0], [0, 0, 1, 0], [], []>} : vector<8x8xf32>, vector<8x8xf32>, vector<8x8xf32> -> vector<8x8xf32>
    %81 = arith.addf %80, %11 : vector<8x8xf32>
    %cst_32 = arith.constant dense<0xFF800000> : vector<8xf32>
    %82 = vector.multi_reduction <maximumf>, %81, %cst_32 [1] : vector<8x8xf32> to vector<8xf32>
    %83 = vector.shape_cast %82 : vector<8xf32> to vector<8x1xf32>
    %84 = vector.broadcast %83 : vector<8x1xf32> to vector<8x8xf32>
    %85 = arith.subf %81, %84 : vector<8x8xf32>
    %86 = math.exp %85 : vector<8x8xf32>
    %cst_33 = arith.constant dense<0.000000e+00> : vector<8xf32>
    %87 = vector.multi_reduction <add>, %86, %cst_33 [1] : vector<8x8xf32> to vector<8xf32>
    %88 = vector.shape_cast %87 : vector<8xf32> to vector<8x1xf32>
    %89 = vector.broadcast %88 : vector<8x1xf32> to vector<8x8xf32>
    %90 = arith.divf %86, %89 : vector<8x8xf32>
    %cst_34 = arith.constant dense<0.000000e+00> : vector<8x8xf32>
    %91 = tpu.matmul %90, %79, %cst_34 {dimension_numbers = #tpu.dot_dimension_numbers<[1], [0], [0], [1], [0, 0, 1, 1], [], []>} : vector<8x8xf32>, vector<8x8xf32>, vector<8x8xf32> -> vector<8x8xf32>
    %92 = vector.extract_strided_slice %12 {offsets = [24, 0], sizes = [8, 32], strides = [1, 1]} : vector<32x32xf32> to vector<8x32xf32>
    %cst_35 = arith.constant dense<0.000000e+00> : vector<8x32xf32>
    %93 = tpu.matmul %91, %92, %cst_35 {dimension_numbers = #tpu.dot_dimension_numbers<[1], [0], [0], [1], [0, 0, 1, 1], [], []>} : vector<8x8xf32>, vector<8x32xf32>, vector<8x32xf32> -> vector<8x32xf32>
    %94 = arith.addf %74, %93 : vector<8x32xf32>
    %95 = vector.broadcast %13 : vector<1x32xf32> to vector<8x32xf32>
    %96 = arith.addf %94, %95 : vector<8x32xf32>
    %c0_36 = arith.constant 0 : index
    %c0_37 = arith.constant 0 : index
    %c0_38 = arith.constant 0 : index
    %97 = vector.load %arg5[%c0_36, %c0_37, %c0_38] : memref<2x8x32xf32, #tpu.memory_space<vmem>>, vector<1x8x32xf32>
    %98 = vector.shape_cast %97 : vector<1x8x32xf32> to vector<8x32xf32>
    %99 = vector.shape_cast %96 : vector<8x32xf32> to vector<1x8x32xf32>
    tpu.vector_store %arg5[%c0_36, %c0_37, %c0_38], %99 {strides = array<i32>} : memref<2x8x32xf32, #tpu.memory_space<vmem>>, vector<1x8x32xf32>,
    %cst_39 = arith.constant 0.000000e+00 : f32
    %100 = vector.broadcast %cst_39 : f32 to vector<8x32xf32>
    %101 = vector.extract_strided_slice %5 {offsets = [8, 0], sizes = [8, 8], strides = [1, 1]} : vector<16x96xf32> to vector<8x8xf32>
    %cst_40 = arith.constant 0.353553385 : f32
    %102 = vector.broadcast %cst_40 : f32 to vector<8x8xf32>
    %103 = arith.mulf %101, %102 : vector<8x8xf32>
    %104 = vector.extract_strided_slice %5 {offsets = [8, 32], sizes = [8, 8], strides = [1, 1]} : vector<16x96xf32> to vector<8x8xf32>
    %105 = vector.extract_strided_slice %5 {offsets = [8, 64], sizes = [8, 8], strides = [1, 1]} : vector<16x96xf32> to vector<8x8xf32>
    %cst_41 = arith.constant dense<0.000000e+00> : vector<8x8xf32>
    %106 = tpu.matmul %103, %104, %cst_41 {dimension_numbers = #tpu.dot_dimension_numbers<[1], [1], [0], [0], [0, 0, 1, 0], [], []>} : vector<8x8xf32>, vector<8x8xf32>, vector<8x8xf32> -> vector<8x8xf32>
    %107 = arith.addf %106, %11 : vector<8x8xf32>
    %cst_42 = arith.constant dense<0xFF800000> : vector<8xf32>
    %108 = vector.multi_reduction <maximumf>, %107, %cst_42 [1] : vector<8x8xf32> to vector<8xf32>
    %109 = vector.shape_cast %108 : vector<8xf32> to vector<8x1xf32>
    %110 = vector.broadcast %109 : vector<8x1xf32> to vector<8x8xf32>
    %111 = arith.subf %107, %110 : vector<8x8xf32>
    %112 = math.exp %111 : vector<8x8xf32>
    %cst_43 = arith.constant dense<0.000000e+00> : vector<8xf32>
    %113 = vector.multi_reduction <add>, %112, %cst_43 [1] : vector<8x8xf32> to vector<8xf32>
    %114 = vector.shape_cast %113 : vector<8xf32> to vector<8x1xf32>
    %115 = vector.broadcast %114 : vector<8x1xf32> to vector<8x8xf32>
    %116 = arith.divf %112, %115 : vector<8x8xf32>
    %cst_44 = arith.constant dense<0.000000e+00> : vector<8x8xf32>
    %117 = tpu.matmul %116, %105, %cst_44 {dimension_numbers = #tpu.dot_dimension_numbers<[1], [0], [0], [1], [0, 0, 1, 1], [], []>} : vector<8x8xf32>, vector<8x8xf32>, vector<8x8xf32> -> vector<8x8xf32>
    %118 = vector.extract_strided_slice %12 {offsets = [0, 0], sizes = [8, 32], strides = [1, 1]} : vector<32x32xf32> to vector<8x32xf32>
    %cst_45 = arith.constant dense<0.000000e+00> : vector<8x32xf32>
    %119 = tpu.matmul %117, %118, %cst_45 {dimension_numbers = #tpu.dot_dimension_numbers<[1], [0], [0], [1], [0, 0, 1, 1], [], []>} : vector<8x8xf32>, vector<8x32xf32>, vector<8x32xf32> -> vector<8x32xf32>
    %120 = arith.addf %100, %119 : vector<8x32xf32>
    %121 = vector.extract_strided_slice %5 {offsets = [8, 8], sizes = [8, 8], strides = [1, 1]} : vector<16x96xf32> to vector<8x8xf32>
    %cst_46 = arith.constant 0.353553385 : f32
    %122 = vector.broadcast %cst_46 : f32 to vector<8x8xf32>
    %123 = arith.mulf %121, %122 : vector<8x8xf32>
    %124 = vector.extract_strided_slice %5 {offsets = [8, 40], sizes = [8, 8], strides = [1, 1]} : vector<16x96xf32> to vector<8x8xf32>
    %125 = vector.extract_strided_slice %5 {offsets = [8, 72], sizes = [8, 8], strides = [1, 1]} : vector<16x96xf32> to vector<8x8xf32>
    %cst_47 = arith.constant dense<0.000000e+00> : vector<8x8xf32>
    %126 = tpu.matmul %123, %124, %cst_47 {dimension_numbers = #tpu.dot_dimension_numbers<[1], [1], [0], [0], [0, 0, 1, 0], [], []>} : vector<8x8xf32>, vector<8x8xf32>, vector<8x8xf32> -> vector<8x8xf32>
    %127 = arith.addf %126, %11 : vector<8x8xf32>
    %cst_48 = arith.constant dense<0xFF800000> : vector<8xf32>
    %128 = vector.multi_reduction <maximumf>, %127, %cst_48 [1] : vector<8x8xf32> to vector<8xf32>
    %129 = vector.shape_cast %128 : vector<8xf32> to vector<8x1xf32>
    %130 = vector.broadcast %129 : vector<8x1xf32> to vector<8x8xf32>
    %131 = arith.subf %127, %130 : vector<8x8xf32>
    %132 = math.exp %131 : vector<8x8xf32>
    %cst_49 = arith.constant dense<0.000000e+00> : vector<8xf32>
    %133 = vector.multi_reduction <add>, %132, %cst_49 [1] : vector<8x8xf32> to vector<8xf32>
    %134 = vector.shape_cast %133 : vector<8xf32> to vector<8x1xf32>
    %135 = vector.broadcast %134 : vector<8x1xf32> to vector<8x8xf32>
    %136 = arith.divf %132, %135 : vector<8x8xf32>
    %cst_50 = arith.constant dense<0.000000e+00> : vector<8x8xf32>
    %137 = tpu.matmul %136, %125, %cst_50 {dimension_numbers = #tpu.dot_dimension_numbers<[1], [0], [0], [1], [0, 0, 1, 1], [], []>} : vector<8x8xf32>, vector<8x8xf32>, vector<8x8xf32> -> vector<8x8xf32>
    %138 = vector.extract_strided_slice %12 {offsets = [8, 0], sizes = [8, 32], strides = [1, 1]} : vector<32x32xf32> to vector<8x32xf32>
    %cst_51 = arith.constant dense<0.000000e+00> : vector<8x32xf32>
    %139 = tpu.matmul %137, %138, %cst_51 {dimension_numbers = #tpu.dot_dimension_numbers<[1], [0], [0], [1], [0, 0, 1, 1], [], []>} : vector<8x8xf32>, vector<8x32xf32>, vector<8x32xf32> -> vector<8x32xf32>
    %140 = arith.addf %120, %139 : vector<8x32xf32>
    %141 = vector.extract_strided_slice %5 {offsets = [8, 16], sizes = [8, 8], strides = [1, 1]} : vector<16x96xf32> to vector<8x8xf32>
    %cst_52 = arith.constant 0.353553385 : f32
    %142 = vector.broadcast %cst_52 : f32 to vector<8x8xf32>
    %143 = arith.mulf %141, %142 : vector<8x8xf32>
    %144 = vector.extract_strided_slice %5 {offsets = [8, 48], sizes = [8, 8], strides = [1, 1]} : vector<16x96xf32> to vector<8x8xf32>
    %145 = vector.extract_strided_slice %5 {offsets = [8, 80], sizes = [8, 8], strides = [1, 1]} : vector<16x96xf32> to vector<8x8xf32>
    %cst_53 = arith.constant dense<0.000000e+00> : vector<8x8xf32>
    %146 = tpu.matmul %143, %144, %cst_53 {dimension_numbers = #tpu.dot_dimension_numbers<[1], [1], [0], [0], [0, 0, 1, 0], [], []>} : vector<8x8xf32>, vector<8x8xf32>, vector<8x8xf32> -> vector<8x8xf32>
    %147 = arith.addf %146, %11 : vector<8x8xf32>
    %cst_54 = arith.constant dense<0xFF800000> : vector<8xf32>
    %148 = vector.multi_reduction <maximumf>, %147, %cst_54 [1] : vector<8x8xf32> to vector<8xf32>
    %149 = vector.shape_cast %148 : vector<8xf32> to vector<8x1xf32>
    %150 = vector.broadcast %149 : vector<8x1xf32> to vector<8x8xf32>
    %151 = arith.subf %147, %150 : vector<8x8xf32>
    %152 = math.exp %151 : vector<8x8xf32>
    %cst_55 = arith.constant dense<0.000000e+00> : vector<8xf32>
    %153 = vector.multi_reduction <add>, %152, %cst_55 [1] : vector<8x8xf32> to vector<8xf32>
    %154 = vector.shape_cast %153 : vector<8xf32> to vector<8x1xf32>
    %155 = vector.broadcast %154 : vector<8x1xf32> to vector<8x8xf32>
    %156 = arith.divf %152, %155 : vector<8x8xf32>
    %cst_56 = arith.constant dense<0.000000e+00> : vector<8x8xf32>
    %157 = tpu.matmul %156, %145, %cst_56 {dimension_numbers = #tpu.dot_dimension_numbers<[1], [0], [0], [1], [0, 0, 1, 1], [], []>} : vector<8x8xf32>, vector<8x8xf32>, vector<8x8xf32> -> vector<8x8xf32>
    %158 = vector.extract_strided_slice %12 {offsets = [16, 0], sizes = [8, 32], strides = [1, 1]} : vector<32x32xf32> to vector<8x32xf32>
    %cst_57 = arith.constant dense<0.000000e+00> : vector<8x32xf32>
    %159 = tpu.matmul %157, %158, %cst_57 {dimension_numbers = #tpu.dot_dimension_numbers<[1], [0], [0], [1], [0, 0, 1, 1], [], []>} : vector<8x8xf32>, vector<8x32xf32>, vector<8x32xf32> -> vector<8x32xf32>
    %160 = arith.addf %140, %159 : vector<8x32xf32>
    %161 = vector.extract_strided_slice %5 {offsets = [8, 24], sizes = [8, 8], strides = [1, 1]} : vector<16x96xf32> to vector<8x8xf32>
    %cst_58 = arith.constant 0.353553385 : f32
    %162 = vector.broadcast %cst_58 : f32 to vector<8x8xf32>
    %163 = arith.mulf %161, %162 : vector<8x8xf32>
    %164 = vector.extract_strided_slice %5 {offsets = [8, 56], sizes = [8, 8], strides = [1, 1]} : vector<16x96xf32> to vector<8x8xf32>
    %165 = vector.extract_strided_slice %5 {offsets = [8, 88], sizes = [8, 8], strides = [1, 1]} : vector<16x96xf32> to vector<8x8xf32>
    %cst_59 = arith.constant dense<0.000000e+00> : vector<8x8xf32>
    %166 = tpu.matmul %163, %164, %cst_59 {dimension_numbers = #tpu.dot_dimension_numbers<[1], [1], [0], [0], [0, 0, 1, 0], [], []>} : vector<8x8xf32>, vector<8x8xf32>, vector<8x8xf32> -> vector<8x8xf32>
    %167 = arith.addf %166, %11 : vector<8x8xf32>
    %cst_60 = arith.constant dense<0xFF800000> : vector<8xf32>
    %168 = vector.multi_reduction <maximumf>, %167, %cst_60 [1] : vector<8x8xf32> to vector<8xf32>
    %169 = vector.shape_cast %168 : vector<8xf32> to vector<8x1xf32>
    %170 = vector.broadcast %169 : vector<8x1xf32> to vector<8x8xf32>
    %171 = arith.subf %167, %170 : vector<8x8xf32>
    %172 = math.exp %171 : vector<8x8xf32>
    %cst_61 = arith.constant dense<0.000000e+00> : vector<8xf32>
    %173 = vector.multi_reduction <add>, %172, %cst_61 [1] : vector<8x8xf32> to vector<8xf32>
    %174 = vector.shape_cast %173 : vector<8xf32> to vector<8x1xf32>
    %175 = vector.broadcast %174 : vector<8x1xf32> to vector<8x8xf32>
    %176 = arith.divf %172, %175 : vector<8x8xf32>
    %cst_62 = arith.constant dense<0.000000e+00> : vector<8x8xf32>
    %177 = tpu.matmul %176, %165, %cst_62 {dimension_numbers = #tpu.dot_dimension_numbers<[1], [0], [0], [1], [0, 0, 1, 1], [], []>} : vector<8x8xf32>, vector<8x8xf32>, vector<8x8xf32> -> vector<8x8xf32>
    %178 = vector.extract_strided_slice %12 {offsets = [24, 0], sizes = [8, 32], strides = [1, 1]} : vector<32x32xf32> to vector<8x32xf32>
    %cst_63 = arith.constant dense<0.000000e+00> : vector<8x32xf32>
    %179 = tpu.matmul %177, %178, %cst_63 {dimension_numbers = #tpu.dot_dimension_numbers<[1], [0], [0], [1], [0, 0, 1, 1], [], []>} : vector<8x8xf32>, vector<8x32xf32>, vector<8x32xf32> -> vector<8x32xf32>
    %180 = arith.addf %160, %179 : vector<8x32xf32>
    %181 = vector.broadcast %13 : vector<1x32xf32> to vector<8x32xf32>
    %182 = arith.addf %180, %181 : vector<8x32xf32>
    %c1 = arith.constant 1 : index
    %c0_64 = arith.constant 0 : index
    %c0_65 = arith.constant 0 : index
    %183 = vector.load %arg5[%c1, %c0_64, %c0_65] : memref<2x8x32xf32, #tpu.memory_space<vmem>>, vector<1x8x32xf32>
    %184 = vector.shape_cast %183 : vector<1x8x32xf32> to vector<8x32xf32>
    %185 = vector.shape_cast %182 : vector<8x32xf32> to vector<1x8x32xf32>
    tpu.vector_store %arg5[%c1, %c0_64, %c0_65], %185 {strides = array<i32>} : memref<2x8x32xf32, #tpu.memory_space<vmem>>, vector<1x8x32xf32>,
    return
  }
}

</mosaic_0001>

<llo_original>
// kernel: tpu_custom_call.1
$region0: #{tpu_custom_call.1}
  #allocation0 [shape = 'u32[]', space=smem, size = 0x4, offset = 0x4, fixed_abs, tag = 'smem constant byte address 0x4 - core index']
  #allocation1 [shape = 'u32[144,128]{1,0:T(1,128)}', space=vmem, size = 0x12000, scoped, tag = 'internal scratch']
  %s0 = inlined_call_operand.hbm [shape: f32[16,32], index: 0, kind: input, shape index: {}]
  %s1 = inlined_call_operand.hbm [shape: f32[32,96], index: 1, kind: input, shape index: {}]
  %s2 = inlined_call_operand.vmem [shape: f32[1,96], index: 2, kind: input, shape index: {}]
  %s3 = inlined_call_operand.hbm [shape: f32[32,32], index: 3, kind: input, shape index: {}]
  %s4 = inlined_call_operand.vmem [shape: f32[1,32], index: 4, kind: input, shape index: {}]
  %s5 = inlined_call_operand.hbm [shape: f32[2,8,32], index: 5, kind: output, shape index: {}]
  %s6 = sld [smem:[#allocation0]]
  $region42: #{tpu_custom_call.1} parent=0
    _
  %s8 = ssub.s32 1, %s6
  %s9 = scalar_select 0, %s8, %s6
  $region1: #{tpu_custom_call.1} parent=0
    #allocation2 [shape = 'u8[8192]{0}', space=vmem, size = 0x2000, scoped, tag = 'input window, operand 0, single buffered']
    #allocation3 [shape = 's32[1]{0}', space=sflag, size = 0x4, scoped, tag = 'scoped memory for tpu_custom_call.1']
    #allocation4 [shape = 's32[1]{0}', space=sflag, size = 0x4, scoped, tag = 'scoped memory for tpu_custom_call.1']
    #allocation5 [shape = 'u8[16384]{0}', space=vmem, size = 0x4000, scoped, tag = 'input window, operand 1, single buffered']
    #allocation6 [shape = 's32[1]{0}', space=sflag, size = 0x4, scoped, tag = 'scoped memory for tpu_custom_call.1']
    #allocation7 [shape = 'u8[16384]{0}', space=vmem, size = 0x4000, scoped, tag = 'input window, operand 3, single buffered']
    #allocation8 [shape = 'u8[8192]{0}', space=vmem, size = 0x2000, scoped, tag = 'output window, operand 0, single buffered']
    %10 = vsyncpa [#allocation3], 0
    %11 = vsyncpa [#allocation6], 0
    %12 = vsyncpa [#allocation4], 0
    // Predicated region
    $region2: #{tpu_custom_call.1} parent=1 // pred_check
      _
    $region3: #{tpu_custom_call.1} parent=1 // pred_check_branch
      %14 = sbr.rel (0) target = $region5
    $region4: #{tpu_custom_call.1} parent=1 // pred_region
      %s16 = ssub.s32 256, 256
      %17 = vsyncadd [#allocation3], %s16
      %s18 = sshll.u32 [#allocation2], 4
      %s19 = int_to_ptr.vmem [resolvable:$true] %s18
      %24 = dma.hbm_to_vmem [thread:$0]  %s0, 256, %s19, [#allocation3], 128, 128, 8
    $region5: #{tpu_custom_call.1} parent=1 // pred_fallthru
      _
    // Predicated region
    $region6: #{tpu_custom_call.1} parent=1 // pred_check
      _
    $region7: #{tpu_custom_call.1} parent=1 // pred_check_branch
      %26 = sbr.rel (0) target = $region9
    $region8: #{tpu_custom_call.1} parent=1 // pred_region
      %s28 = ssub.s32 512, 512
      %29 = vsyncadd [#allocation6], %s28
      %s30 = sshll.u32 [#allocation5], 4
      %s31 = int_to_ptr.vmem [resolvable:$true] %s30
      %36 = dma.hbm_to_vmem [thread:$0]  %s1, 512, %s31, [#allocation6], 128, 128, 8
    $region9: #{tpu_custom_call.1} parent=1 // pred_fallthru
      _
    // Predicated region
    $region10: #{tpu_custom_call.1} parent=1 // pred_check
      _
    $region11: #{tpu_custom_call.1} parent=1 // pred_check_branch
      %38 = sbr.rel (0) target = $region13
    $region12: #{tpu_custom_call.1} parent=1 // pred_region
      _
    $region13: #{tpu_custom_call.1} parent=1 // pred_fallthru
      _
    // Predicated region
    $region14: #{tpu_custom_call.1} parent=1 // pred_check
      _
    $region15: #{tpu_custom_call.1} parent=1 // pred_check_branch
      %40 = sbr.rel (0) target = $region17
    $region16: #{tpu_custom_call.1} parent=1 // pred_region
      %s42 = ssub.s32 512, 512
      %43 = vsyncadd [#allocation6], %s42
      %s44 = sshll.u32 [#allocation7], 4
      %s45 = int_to_ptr.vmem [resolvable:$true] %s44
      %50 = dma.hbm_to_vmem [thread:$0]  %s3, 512, %s45, [#allocation6], 128, 128, 8
    $region17: #{tpu_custom_call.1} parent=1 // pred_fallthru
      _
    // Predicated region
    $region18: #{tpu_custom_call.1} parent=1 // pred_check
      _
    $region19: #{tpu_custom_call.1} parent=1 // pred_check_branch
      %52 = sbr.rel (0) target = $region21
    $region20: #{tpu_custom_call.1} parent=1 // pred_region
      _
    $region21: #{tpu_custom_call.1} parent=1 // pred_fallthru
      _
    // Predicated region
    $region22: #{tpu_custom_call.1} parent=1 // pred_check
      _
    $region23: #{tpu_custom_call.1} parent=1 // pred_check_branch
      %54 = sbr.rel (0) target = $region25
    $region24: #{tpu_custom_call.1} parent=1 // pred_region
      %55 = dma.done [#allocation3], 256
    $region25: #{tpu_custom_call.1} parent=1 // pred_fallthru
      _
    // Predicated region
    $region26: #{tpu_custom_call.1} parent=1 // pred_check
      _
    $region27: #{tpu_custom_call.1} parent=1 // pred_check_branch
      %57 = sbr.rel (0) target = $region29
    $region28: #{tpu_custom_call.1} parent=1 // pred_region
      %58 = dma.done [#allocation6], 512
    $region29: #{tpu_custom_call.1} parent=1 // pred_fallthru
      _
    // Predicated region
    $region30: #{tpu_custom_call.1} parent=1 // pred_check
      _
    $region31: #{tpu_custom_call.1} parent=1 // pred_check_branch
      %60 = sbr.rel (0) target = $region33
    $region32: #{tpu_custom_call.1} parent=1 // pred_region
      %61 = dma.done [#allocation6], 512
    $region33: #{tpu_custom_call.1} parent=1 // pred_fallthru
      _
    %v62 = vld [vmem:[#allocation2] sm:$0xff]
    %v63 = vld [vmem:[#allocation2 + $0x8] sm:$0xff]
    %v64 = vld [vmem:[#allocation5] sm:$0xff]
    %v65 = vld [vmem:[#allocation5 + $0x8] sm:$0xff]
    %v66 = vld [vmem:[#allocation5 + $0x10] sm:$0xff]
    %v67 = vld [vmem:[#allocation5 + $0x18] sm:$0xff]
    %v68 = vld [vmem:[%s2] sm:$0x1]
    %v70 = vlaneseq
    %v71 = vshrl.u32 %v70, 7
    %v72 = vsub.s32 0, %v71
    %v73 = vrot.slane %v68, %v72
    %vm75 = vcmask 261120
    %v77 = vsel %vm75, %v62, 0
    %v80 = vsel %vm75, %v63, 0
    %82 = vmatprep.subr.mxu0 0.0
    %83 = vmatpush1.msra.mxu0 %v64
    %84 = vmatprep.subr.mxu0 0.0
    %85 = vmatpush1.msra.mxu0 %v65
    %86 = vmatprep.subr.mxu0 0.0
    %87 = vmatpush1.msra.mxu0 %v66
    %88 = vmatprep.subr.mxu0 0.0
    %89 = vmatpush1.msra.mxu0 %v67
    %90 = vmatprep.subr.mxu0 0.0
    %91 = vmatpush1.msra.mxu0 0.0
    %92 = vmatprep.subr.mxu0 0.0
    %93 = vmatpush1.msra.mxu0 0.0
    %94 = vmatprep.subr.mxu0 0.0
    %95 = vmatpush1.msra.mxu0 0.0
    %96 = vmatprep.subr.mxu0 0.0
    %97 = vmatpush1.msra.mxu0 0.0
    %98 = vmatprep.subr.mxu0 0.0
    %99 = vmatpush1.msra.mxu0 0.0
    %100 = vmatprep.subr.mxu0 0.0
    %101 = vmatpush1.msra.mxu0 0.0
    %102 = vmatprep.subr.mxu0 0.0
    %103 = vmatpush1.msra.mxu0 0.0
    %104 = vmatprep.subr.mxu0 0.0
    %105 = vmatpush1.msra.mxu0 0.0
    %106 = vmatprep.subr.mxu0 0.0
    %107 = vmatpush1.msra.mxu0 0.0
    %108 = vmatprep.subr.mxu0 0.0
    %109 = vmatpush1.msra.mxu0 0.0
    %110 = vmatprep.subr.mxu0 0.0
    %111 = vmatpush1.msra.mxu0 0.0
    %112 = vmatprep.subr.mxu0 0.0
    %113 = vmatpush1.msra.mxu0 0.0
    %114 = vmatprep.subr.mxu0 0.0
    %115 = vmatpush1.msra.mxu0 0.0
    %116 = vmatprep.subr.mxu0 0.0
    %117 = vmatpush1.msra.mxu0 0.0
    %118 = vmatprep.subr.mxu0 0.0
    %119 = vmatpush1.msra.mxu0 0.0
    %120 = vmatprep.subr.mxu0 0.0
    %121 = vmatpush1.msra.mxu0 0.0
    %122 = vmatprep.subr.mxu0 0.0
    %123 = vmatpush1.msra.mxu0 0.0
    %124 = vmatprep.subr.mxu0 0.0
    %125 = vmatpush1.msra.mxu0 0.0
    %126 = vmatprep.subr.mxu0 0.0
    %127 = vmatpush1.msra.mxu0 0.0
    %128 = vmatprep.subr.mxu0 0.0
    %129 = vmatpush1.msra.mxu0 0.0
    %130 = vmatprep.subr.mxu0 0.0
    %131 = vmatpush1.msra.mxu0 0.0
    %132 = vmatprep.subr.mxu0 0.0
    %133 = vmatpush1.msra.mxu0 0.0
    %134 = vmatprep.subr.mxu0 0.0
    %135 = vmatpush1.msra.mxu0 0.0
    %136 = vmatprep.subr.mxu0 0.0
    %137 = vmatpush1.msra.mxu0 0.0
    %138 = vmatprep.subr.mxu0 0.0
    %139 = vmatpush1.msra.mxu0 0.0
    %140 = vmatprep.subr.mxu0 0.0
    %141 = vmatpush1.msra.mxu0 0.0
    %142 = vmatprep.subr.mxu0 0.0
    %143 = vmatpush1.msra.mxu0 0.0
    %144 = vmatprep.subr.mxu0 0.0
    %145 = vmatpush1.msra.mxu0 0.0
    %146 = vmatprep.mubr.f32.mxu0 0.0
    %147 = vmatmul.mubr.f32.gmra.mrb[0].mxu0 %v77
    %v148 = vpop.f32.mrb[0].mxu0
    %v149 = vadd.f32 %v73, %v148
    %v150 = vpop.f32.mrb[0].mxu0
    %151 = vmatprep.mubr.f32.mxu0 0.0
    %152 = vmatmul.mubr.f32.gmra.mrb[0].mxu0 %v80
    %v153 = vpop.f32.mrb[0].mxu0
    %v154 = vadd.f32 %v73, %v153
    %v155 = vpop.f32.mrb[0].mxu0
    %156 = vdwg.mxu0
    %v157 = vlaneseq
    %v158 = vshrl.u32 %v157, 7
    %v159 = vlaneseq
    %v160 = vand.u32 %v159, 127
    %vm161 = vcmp.ge.s32.totalorder %v158, %v160
    %v162 = vsel %vm161, 1.0, 0.0
    %v163 = vld [vmem:[#allocation7] sm:$0xff]
    %v164 = vld [vmem:[#allocation7 + $0x8] sm:$0xff]
    %v165 = vld [vmem:[#allocation7 + $0x10] sm:$0xff]
    %v166 = vld [vmem:[#allocation7 + $0x18] sm:$0xff]
    %v167 = vld [vmem:[%s4] sm:$0x1]
    %v168 = vmul.f32 %v149, 0.35355338
    %170 = vrot.lane.b32.xlu0 %v149, 96
    %v171 = vpop.permute.xlu0 %170
    %vm172 = vcmask 64512
    %v174 = vsel %vm172, %v168, 0
    %v176 = vsel %vm172, %v171, 0
    %178 = vmatprep.subr.mxu0 0.0
    %179 = vmatpush1.xpose.msra.mxu0 %v176
    %180 = vmatprep.subr.mxu0 0.0
    %181 = vmatpush1.xpose.msra.mxu0 0.0
    %182 = vmatprep.subr.mxu0 0.0
    %183 = vmatpush1.xpose.msra.mxu0 0.0
    %184 = vmatprep.subr.mxu0 0.0
    %185 = vmatpush1.xpose.msra.mxu0 0.0
    %186 = vmatprep.subr.mxu0 0.0
    %187 = vmatpush1.xpose.msra.mxu0 0.0
    %188 = vmatprep.subr.mxu0 0.0
    %189 = vmatpush1.xpose.msra.mxu0 0.0
    %190 = vmatprep.subr.mxu0 0.0
    %191 = vmatpush1.xpose.msra.mxu0 0.0
    %192 = vmatprep.subr.mxu0 0.0
    %193 = vmatpush1.xpose.msra.mxu0 0.0
    %194 = vmatprep.subr.mxu0 0.0
    %195 = vmatpush1.xpose.msra.mxu0 0.0
    %196 = vmatprep.subr.mxu0 0.0
    %197 = vmatpush1.xpose.msra.mxu0 0.0
    %198 = vmatprep.subr.mxu0 0.0
    %199 = vmatpush1.xpose.msra.mxu0 0.0
    %200 = vmatprep.subr.mxu0 0.0
    %201 = vmatpush1.xpose.msra.mxu0 0.0
    %202 = vmatprep.subr.mxu0 0.0
    %203 = vmatpush1.xpose.msra.mxu0 0.0
    %204 = vmatprep.subr.mxu0 0.0
    %205 = vmatpush1.xpose.msra.mxu0 0.0
    %206 = vmatprep.subr.mxu0 0.0
    %207 = vmatpush1.xpose.msra.mxu0 0.0
    %208 = vmatprep.subr.mxu0 0.0
    %209 = vmatpush1.xpose.msra.mxu0 0.0
    %210 = vmatprep.subr.mxu0 0.0
    %211 = vmatpush1.xpose.msra.mxu0 0.0
    %212 = vmatprep.subr.mxu0 0.0
    %213 = vmatpush1.xpose.msra.mxu0 0.0
    %214 = vmatprep.subr.mxu0 0.0
    %215 = vmatpush1.xpose.msra.mxu0 0.0
    %216 = vmatprep.subr.mxu0 0.0
    %217 = vmatpush1.xpose.msra.mxu0 0.0
    %218 = vmatprep.subr.mxu0 0.0
    %219 = vmatpush1.xpose.msra.mxu0 0.0
    %220 = vmatprep.subr.mxu0 0.0
    %221 = vmatpush1.xpose.msra.mxu0 0.0
    %222 = vmatprep.subr.mxu0 0.0
    %223 = vmatpush1.xpose.msra.mxu0 0.0
    %224 = vmatprep.subr.mxu0 0.0
    %225 = vmatpush1.xpose.msra.mxu0 0.0
    %226 = vmatprep.subr.mxu0 0.0
    %227 = vmatpush1.xpose.msra.mxu0 0.0
    %228 = vmatprep.subr.mxu0 0.0
    %229 = vmatpush1.xpose.msra.mxu0 0.0
    %230 = vmatprep.subr.mxu0 0.0
    %231 = vmatpush1.xpose.msra.mxu0 0.0
    %232 = vmatprep.subr.mxu0 0.0
    %233 = vmatpush1.xpose.msra.mxu0 0.0
    %234 = vmatprep.subr.mxu0 0.0
    %235 = vmatpush1.xpose.msra.mxu0 0.0
    %236 = vmatprep.subr.mxu0 0.0
    %237 = vmatpush1.xpose.msra.mxu0 0.0
    %238 = vmatprep.subr.mxu0 0.0
    %239 = vmatpush1.xpose.msra.mxu0 0.0
    %240 = vmatprep.subr.mxu0 0.0
    %241 = vmatpush1.xpose.msra.mxu0 0.0
    %242 = vmatprep.mubr.f32.mxu0 0.0
    %243 = vmatmul.mubr.f32.gmra.mrb[0].mxu0 %v174
    %v244 = vpop.f32.mrb[0].mxu0
    %v245 = vadd.f32 %v162, %v244
    %v246 = vpop.f32.mrb[0].mxu0
    %247 = vdwg.mxu0
    %v248 = vsel %vm172, %v245, -inf
    %249 = vmax.xlane.f32.xlu0 %v248
    %v250 = vpop.xlane.xlu0 %249
    %v251 = vsub.f32 %v245, %v250
    %v252 = vmul.f32 %v251, 1.442695
    %v253 = vpow.pop %v252
    %v254 = vsel %vm172, %v253, 0.0
    %255 = vadd.xlane.f32.xlu0 %v254
    %v256 = vpop.xlane.xlu0 %255
    %v257 = vrcp.pop %v256
    %v258 = vmul.f32 %v253, %v257
    %259 = vrot.lane.b32.xlu0 %v149, 64
    %v260 = vpop.permute.xlu0 %259
    %v263 = vsel %vm172, %v258, 0
    %265 = vmatprep.subr.mxu0 0.0
    %266 = vmatpush1.msra.mxu0 %v260
    %267 = vmatprep.subr.mxu0 0.0
    %268 = vmatpush1.msra.mxu0 0.0
    %269 = vmatprep.subr.mxu0 0.0
    %270 = vmatpush1.msra.mxu0 0.0
    %271 = vmatprep.subr.mxu0 0.0
    %272 = vmatpush1.msra.mxu0 0.0
    %273 = vmatprep.subr.mxu0 0.0
    %274 = vmatpush1.msra.mxu0 0.0
    %275 = vmatprep.subr.mxu0 0.0
    %276 = vmatpush1.msra.mxu0 0.0
    %277 = vmatprep.subr.mxu0 0.0
    %278 = vmatpush1.msra.mxu0 0.0
    %279 = vmatprep.subr.mxu0 0.0
    %280 = vmatpush1.msra.mxu0 0.0
    %281 = vmatprep.subr.mxu0 0.0
    %282 = vmatpush1.msra.mxu0 0.0
    %283 = vmatprep.subr.mxu0 0.0
    %284 = vmatpush1.msra.mxu0 0.0
    %285 = vmatprep.subr.mxu0 0.0
    %286 = vmatpush1.msra.mxu0 0.0
    %287 = vmatprep.subr.mxu0 0.0
    %288 = vmatpush1.msra.mxu0 0.0
    %289 = vmatprep.subr.mxu0 0.0
    %290 = vmatpush1.msra.mxu0 0.0
    %291 = vmatprep.subr.mxu0 0.0
    %292 = vmatpush1.msra.mxu0 0.0
    %293 = vmatprep.subr.mxu0 0.0
    %294 = vmatpush1.msra.mxu0 0.0
    %295 = vmatprep.subr.mxu0 0.0
    %296 = vmatpush1.msra.mxu0 0.0
    %297 = vmatprep.subr.mxu0 0.0
    %298 = vmatpush1.msra.mxu0 0.0
    %299 = vmatprep.subr.mxu0 0.0
    %300 = vmatpush1.msra.mxu0 0.0
    %301 = vmatprep.subr.mxu0 0.0
    %302 = vmatpush1.msra.mxu0 0.0
    %303 = vmatprep.subr.mxu0 0.0
    %304 = vmatpush1.msra.mxu0 0.0
    %305 = vmatprep.subr.mxu0 0.0
    %306 = vmatpush1.msra.mxu0 0.0
    %307 = vmatprep.subr.mxu0 0.0
    %308 = vmatpush1.msra.mxu0 0.0
    %309 = vmatprep.subr.mxu0 0.0
    %310 = vmatpush1.msra.mxu0 0.0
    %311 = vmatprep.subr.mxu0 0.0
    %312 = vmatpush1.msra.mxu0 0.0
    %313 = vmatprep.subr.mxu0 0.0
    %314 = vmatpush1.msra.mxu0 0.0
    %315 = vmatprep.subr.mxu0 0.0
    %316 = vmatpush1.msra.mxu0 0.0
    %317 = vmatprep.subr.mxu0 0.0
    %318 = vmatpush1.msra.mxu0 0.0
    %319 = vmatprep.subr.mxu0 0.0
    %320 = vmatpush1.msra.mxu0 0.0
    %321 = vmatprep.subr.mxu0 0.0
    %322 = vmatpush1.msra.mxu0 0.0
    %323 = vmatprep.subr.mxu0 0.0
    %324 = vmatpush1.msra.mxu0 0.0
    %325 = vmatprep.subr.mxu0 0.0
    %326 = vmatpush1.msra.mxu0 0.0
    %327 = vmatprep.subr.mxu0 0.0
    %328 = vmatpush1.msra.mxu0 0.0
    %329 = vmatprep.mubr.f32.mxu0 0.0
    %330 = vmatmul.mubr.f32.gmra.mrb[0].mxu0 %v263
    %v331 = vpop.f32.mrb[0].mxu0
    %v332 = vadd.f32 0.0, %v331
    %v333 = vpop.f32.mrb[0].mxu0
    %334 = vdwg.mxu0
    %335 = vrot.lane.b32.xlu0 %v168, 120
    %v336 = vpop.permute.xlu0 %335
    %337 = vrot.lane.b32.xlu0 %v149, 88
    %v338 = vpop.permute.xlu0 %337
    %v339 = vsel %vm172, %v336, 0
    %v341 = vsel %vm172, %v338, 0
    %343 = vmatprep.subr.mxu0 0.0
    %344 = vmatpush1.xpose.msra.mxu0 %v341
    %345 = vmatprep.subr.mxu0 0.0
    %346 = vmatpush1.xpose.msra.mxu0 0.0
    %347 = vmatprep.subr.mxu0 0.0
    %348 = vmatpush1.xpose.msra.mxu0 0.0
    %349 = vmatprep.subr.mxu0 0.0
    %350 = vmatpush1.xpose.msra.mxu0 0.0
    %351 = vmatprep.subr.mxu0 0.0
    %352 = vmatpush1.xpose.msra.mxu0 0.0
    %353 = vmatprep.subr.mxu0 0.0
    %354 = vmatpush1.xpose.msra.mxu0 0.0
    %355 = vmatprep.subr.mxu0 0.0
    %356 = vmatpush1.xpose.msra.mxu0 0.0
    %357 = vmatprep.subr.mxu0 0.0
    %358 = vmatpush1.xpose.msra.mxu0 0.0
    %359 = vmatprep.subr.mxu0 0.0
    %360 = vmatpush1.xpose.msra.mxu0 0.0
    %361 = vmatprep.subr.mxu0 0.0
    %362 = vmatpush1.xpose.msra.mxu0 0.0
    %363 = vmatprep.subr.mxu0 0.0
    %364 = vmatpush1.xpose.msra.mxu0 0.0
    %365 = vmatprep.subr.mxu0 0.0
    %366 = vmatpush1.xpose.msra.mxu0 0.0
    %367 = vmatprep.subr.mxu0 0.0
    %368 = vmatpush1.xpose.msra.mxu0 0.0
    %369 = vmatprep.subr.mxu0 0.0
    %370 = vmatpush1.xpose.msra.mxu0 0.0
    %371 = vmatprep.subr.mxu0 0.0
    %372 = vmatpush1.xpose.msra.mxu0 0.0
    %373 = vmatprep.subr.mxu0 0.0
    %374 = vmatpush1.xpose.msra.mxu0 0.0
    %375 = vmatprep.subr.mxu0 0.0
    %376 = vmatpush1.xpose.msra.mxu0 0.0
    %377 = vmatprep.subr.mxu0 0.0
    %378 = vmatpush1.xpose.msra.mxu0 0.0
    %379 = vmatprep.subr.mxu0 0.0
    %380 = vmatpush1.xpose.msra.mxu0 0.0
    %381 = vmatprep.subr.mxu0 0.0
    %382 = vmatpush1.xpose.msra.mxu0 0.0
    %383 = vmatprep.subr.mxu0 0.0
    %384 = vmatpush1.xpose.msra.mxu0 0.0
    %385 = vmatprep.subr.mxu0 0.0
    %386 = vmatpush1.xpose.msra.mxu0 0.0
    %387 = vmatprep.subr.mxu0 0.0
    %388 = vmatpush1.xpose.msra.mxu0 0.0
    %389 = vmatprep.subr.mxu0 0.0
    %390 = vmatpush1.xpose.msra.mxu0 0.0
    %391 = vmatprep.subr.mxu0 0.0
    %392 = vmatpush1.xpose.msra.mxu0 0.0
    %393 = vmatprep.subr.mxu0 0.0
    %394 = vmatpush1.xpose.msra.mxu0 0.0
    %395 = vmatprep.subr.mxu0 0.0
    %396 = vmatpush1.xpose.msra.mxu0 0.0
    %397 = vmatprep.subr.mxu0 0.0
    %398 = vmatpush1.xpose.msra.mxu0 0.0
    %399 = vmatprep.subr.mxu0 0.0
    %400 = vmatpush1.xpose.msra.mxu0 0.0
    %401 = vmatprep.subr.mxu0 0.0
    %402 = vmatpush1.xpose.msra.mxu0 0.0
    %403 = vmatprep.subr.mxu0 0.0
    %404 = vmatpush1.xpose.msra.mxu0 0.0
    %405 = vmatprep.subr.mxu0 0.0
    %406 = vmatpush1.xpose.msra.mxu0 0.0
    %407 = vmatprep.mubr.f32.mxu0 0.0
    %408 = vmatmul.mubr.f32.gmra.mrb[0].mxu0 %v339
    %v409 = vpop.f32.mrb[0].mxu0
    %v410 = vadd.f32 %v162, %v409
    %v411 = vpop.f32.mrb[0].mxu0
    %412 = vdwg.mxu0
    %v413 = vsel %vm172, %v410, -inf
    %414 = vmax.xlane.f32.xlu0 %v413
    %v415 = vpop.xlane.xlu0 %414
    %v416 = vsub.f32 %v410, %v415
    %v417 = vmul.f32 %v416, 1.442695
    %v418 = vpow.pop %v417
    %v419 = vsel %vm172, %v418, 0.0
    %420 = vadd.xlane.f32.xlu0 %v419
    %v421 = vpop.xlane.xlu0 %420
    %v422 = vrcp.pop %v421
    %v423 = vmul.f32 %v418, %v422
    %424 = vrot.lane.b32.xlu0 %v149, 56
    %v425 = vpop.permute.xlu0 %424
    %v428 = vsel %vm172, %v423, 0
    %430 = vmatprep.subr.mxu0 0.0
    %431 = vmatpush1.msra.mxu0 %v425
    %432 = vmatprep.subr.mxu0 0.0
    %433 = vmatpush1.msra.mxu0 0.0
    %434 = vmatprep.subr.mxu0 0.0
    %435 = vmatpush1.msra.mxu0 0.0
    %436 = vmatprep.subr.mxu0 0.0
    %437 = vmatpush1.msra.mxu0 0.0
    %438 = vmatprep.subr.mxu0 0.0
    %439 = vmatpush1.msra.mxu0 0.0
    %440 = vmatprep.subr.mxu0 0.0
    %441 = vmatpush1.msra.mxu0 0.0
    %442 = vmatprep.subr.mxu0 0.0
    %443 = vmatpush1.msra.mxu0 0.0
    %444 = vmatprep.subr.mxu0 0.0
    %445 = vmatpush1.msra.mxu0 0.0
    %446 = vmatprep.subr.mxu0 0.0
    %447 = vmatpush1.msra.mxu0 0.0
    %448 = vmatprep.subr.mxu0 0.0
    %449 = vmatpush1.msra.mxu0 0.0
    %450 = vmatprep.subr.mxu0 0.0
    %451 = vmatpush1.msra.mxu0 0.0
    %452 = vmatprep.subr.mxu0 0.0
    %453 = vmatpush1.msra.mxu0 0.0
    %454 = vmatprep.subr.mxu0 0.0
    %455 = vmatpush1.msra.mxu0 0.0
    %456 = vmatprep.subr.mxu0 0.0
    %457 = vmatpush1.msra.mxu0 0.0
    %458 = vmatprep.subr.mxu0 0.0
    %459 = vmatpush1.msra.mxu0 0.0
    %460 = vmatprep.subr.mxu0 0.0
    %461 = vmatpush1.msra.mxu0 0.0
    %462 = vmatprep.subr.mxu0 0.0
    %463 = vmatpush1.msra.mxu0 0.0
    %464 = vmatprep.subr.mxu0 0.0
    %465 = vmatpush1.msra.mxu0 0.0
    %466 = vmatprep.subr.mxu0 0.0
    %467 = vmatpush1.msra.mxu0 0.0
    %468 = vmatprep.subr.mxu0 0.0
    %469 = vmatpush1.msra.mxu0 0.0
    %470 = vmatprep.subr.mxu0 0.0
    %471 = vmatpush1.msra.mxu0 0.0
    %472 = vmatprep.subr.mxu0 0.0
    %473 = vmatpush1.msra.mxu0 0.0
    %474 = vmatprep.subr.mxu0 0.0
    %475 = vmatpush1.msra.mxu0 0.0
    %476 = vmatprep.subr.mxu0 0.0
    %477 = vmatpush1.msra.mxu0 0.0
    %478 = vmatprep.subr.mxu0 0.0
    %479 = vmatpush1.msra.mxu0 0.0
    %480 = vmatprep.subr.mxu0 0.0
    %481 = vmatpush1.msra.mxu0 0.0
    %482 = vmatprep.subr.mxu0 0.0
    %483 = vmatpush1.msra.mxu0 0.0
    %484 = vmatprep.subr.mxu0 0.0
    %485 = vmatpush1.msra.mxu0 0.0
    %486 = vmatprep.subr.mxu0 0.0
    %487 = vmatpush1.msra.mxu0 0.0
    %488 = vmatprep.subr.mxu0 0.0
    %489 = vmatpush1.msra.mxu0 0.0
    %490 = vmatprep.subr.mxu0 0.0
    %491 = vmatpush1.msra.mxu0 0.0
    %492 = vmatprep.subr.mxu0 0.0
    %493 = vmatpush1.msra.mxu0 0.0
    %494 = vmatprep.mubr.f32.mxu0 0.0
    %495 = vmatmul.mubr.f32.gmra.mrb[0].mxu0 %v428
    %v496 = vpop.f32.mrb[0].mxu0
    %v497 = vadd.f32 0.0, %v496
    %v498 = vpop.f32.mrb[0].mxu0
    %499 = vdwg.mxu0
    %v501 = vsel %vm172, %v497, 0
    %503 = vmatprep.subr.mxu0 0.0
    %504 = vmatpush1.msra.mxu0 %v164
    %505 = vmatprep.subr.mxu0 0.0
    %506 = vmatpush1.msra.mxu0 0.0
    %507 = vmatprep.subr.mxu0 0.0
    %508 = vmatpush1.msra.mxu0 0.0
    %509 = vmatprep.subr.mxu0 0.0
    %510 = vmatpush1.msra.mxu0 0.0
    %511 = vmatprep.subr.mxu0 0.0
    %512 = vmatpush1.msra.mxu0 0.0
    %513 = vmatprep.subr.mxu0 0.0
    %514 = vmatpush1.msra.mxu0 0.0
    %515 = vmatprep.subr.mxu0 0.0
    %516 = vmatpush1.msra.mxu0 0.0
    %517 = vmatprep.subr.mxu0 0.0
    %518 = vmatpush1.msra.mxu0 0.0
    %519 = vmatprep.subr.mxu0 0.0
    %520 = vmatpush1.msra.mxu0 0.0
    %521 = vmatprep.subr.mxu0 0.0
    %522 = vmatpush1.msra.mxu0 0.0
    %523 = vmatprep.subr.mxu0 0.0
    %524 = vmatpush1.msra.mxu0 0.0
    %525 = vmatprep.subr.mxu0 0.0
    %526 = vmatpush1.msra.mxu0 0.0
    %527 = vmatprep.subr.mxu0 0.0
    %528 = vmatpush1.msra.mxu0 0.0
    %529 = vmatprep.subr.mxu0 0.0
    %530 = vmatpush1.msra.mxu0 0.0
    %531 = vmatprep.subr.mxu0 0.0
    %532 = vmatpush1.msra.mxu0 0.0
    %533 = vmatprep.subr.mxu0 0.0
    %534 = vmatpush1.msra.mxu0 0.0
    %535 = vmatprep.subr.mxu0 0.0
    %536 = vmatpush1.msra.mxu0 0.0
    %537 = vmatprep.subr.mxu0 0.0
    %538 = vmatpush1.msra.mxu0 0.0
    %539 = vmatprep.subr.mxu0 0.0
    %540 = vmatpush1.msra.mxu0 0.0
    %541 = vmatprep.subr.mxu0 0.0
    %542 = vmatpush1.msra.mxu0 0.0
    %543 = vmatprep.subr.mxu0 0.0
    %544 = vmatpush1.msra.mxu0 0.0
    %545 = vmatprep.subr.mxu0 0.0
    %546 = vmatpush1.msra.mxu0 0.0
    %547 = vmatprep.subr.mxu0 0.0
    %548 = vmatpush1.msra.mxu0 0.0
    %549 = vmatprep.subr.mxu0 0.0
    %550 = vmatpush1.msra.mxu0 0.0
    %551 = vmatprep.subr.mxu0 0.0
    %552 = vmatpush1.msra.mxu0 0.0
    %553 = vmatprep.subr.mxu0 0.0
    %554 = vmatpush1.msra.mxu0 0.0
    %555 = vmatprep.subr.mxu0 0.0
    %556 = vmatpush1.msra.mxu0 0.0
    %557 = vmatprep.subr.mxu0 0.0
    %558 = vmatpush1.msra.mxu0 0.0
    %559 = vmatprep.subr.mxu0 0.0
    %560 = vmatpush1.msra.mxu0 0.0
    %561 = vmatprep.subr.mxu0 0.0
    %562 = vmatpush1.msra.mxu0 0.0
    %563 = vmatprep.subr.mxu0 0.0
    %564 = vmatpush1.msra.mxu0 0.0
    %565 = vmatprep.subr.mxu0 0.0
    %566 = vmatpush1.msra.mxu0 0.0
    %567 = vmatprep.mubr.f32.mxu0 0.0
    %568 = vmatmul.mubr.f32.gmra.mrb[0].mxu0 %v501
    %v569 = vpop.f32.mrb[0].mxu0
    %v570 = vadd.f32 0.0, %v569
    %v571 = vpop.f32.mrb[0].mxu0
    %572 = vdwg.mxu0
    %v574 = vsel %vm172, %v332, 0
    %576 = vmatprep.subr.mxu0 0.0
    %577 = vmatpush1.msra.mxu0 %v163
    %578 = vmatprep.subr.mxu0 0.0
    %579 = vmatpush1.msra.mxu0 0.0
    %580 = vmatprep.subr.mxu0 0.0
    %581 = vmatpush1.msra.mxu0 0.0
    %582 = vmatprep.subr.mxu0 0.0
    %583 = vmatpush1.msra.mxu0 0.0
    %584 = vmatprep.subr.mxu0 0.0
    %585 = vmatpush1.msra.mxu0 0.0
    %586 = vmatprep.subr.mxu0 0.0
    %587 = vmatpush1.msra.mxu0 0.0
    %588 = vmatprep.subr.mxu0 0.0
    %589 = vmatpush1.msra.mxu0 0.0
    %590 = vmatprep.subr.mxu0 0.0
    %591 = vmatpush1.msra.mxu0 0.0
    %592 = vmatprep.subr.mxu0 0.0
    %593 = vmatpush1.msra.mxu0 0.0
    %594 = vmatprep.subr.mxu0 0.0
    %595 = vmatpush1.msra.mxu0 0.0
    %596 = vmatprep.subr.mxu0 0.0
    %597 = vmatpush1.msra.mxu0 0.0
    %598 = vmatprep.subr.mxu0 0.0
    %599 = vmatpush1.msra.mxu0 0.0
    %600 = vmatprep.subr.mxu0 0.0
    %601 = vmatpush1.msra.mxu0 0.0
    %602 = vmatprep.subr.mxu0 0.0
    %603 = vmatpush1.msra.mxu0 0.0
    %604 = vmatprep.subr.mxu0 0.0
    %605 = vmatpush1.msra.mxu0 0.0
    %606 = vmatprep.subr.mxu0 0.0
    %607 = vmatpush1.msra.mxu0 0.0
    %608 = vmatprep.subr.mxu0 0.0
    %609 = vmatpush1.msra.mxu0 0.0
    %610 = vmatprep.subr.mxu0 0.0
    %611 = vmatpush1.msra.mxu0 0.0
    %612 = vmatprep.subr.mxu0 0.0
    %613 = vmatpush1.msra.mxu0 0.0
    %614 = vmatprep.subr.mxu0 0.0
    %615 = vmatpush1.msra.mxu0 0.0
    %616 = vmatprep.subr.mxu0 0.0
    %617 = vmatpush1.msra.mxu0 0.0
    %618 = vmatprep.subr.mxu0 0.0
    %619 = vmatpush1.msra.mxu0 0.0
    %620 = vmatprep.subr.mxu0 0.0
    %621 = vmatpush1.msra.mxu0 0.0
    %622 = vmatprep.subr.mxu0 0.0
    %623 = vmatpush1.msra.mxu0 0.0
    %624 = vmatprep.subr.mxu0 0.0
    %625 = vmatpush1.msra.mxu0 0.0
    %626 = vmatprep.subr.mxu0 0.0
    %627 = vmatpush1.msra.mxu0 0.0
    %628 = vmatprep.subr.mxu0 0.0
    %629 = vmatpush1.msra.mxu0 0.0
    %630 = vmatprep.subr.mxu0 0.0
    %631 = vmatpush1.msra.mxu0 0.0
    %632 = vmatprep.subr.mxu0 0.0
    %633 = vmatpush1.msra.mxu0 0.0
    %634 = vmatprep.subr.mxu0 0.0
    %635 = vmatpush1.msra.mxu0 0.0
    %636 = vmatprep.subr.mxu0 0.0
    %637 = vmatpush1.msra.mxu0 0.0
    %638 = vmatprep.subr.mxu0 0.0
    %639 = vmatpush1.msra.mxu0 0.0
    %640 = vmatprep.mubr.f32.mxu0 0.0
    %641 = vmatmul.mubr.f32.gmra.mrb[0].mxu0 %v574
    %v642 = vpop.f32.mrb[0].mxu0
    %v643 = vadd.f32 %v570, %v642
    %v644 = vpop.f32.mrb[0].mxu0
    %645 = vdwg.mxu0
    %646 = vrot.lane.b32.xlu0 %v168, 112
    %v647 = vpop.permute.xlu0 %646
    %648 = vrot.lane.b32.xlu0 %v149, 80
    %v649 = vpop.permute.xlu0 %648
    %v650 = vsel %vm172, %v647, 0
    %v652 = vsel %vm172, %v649, 0
    %654 = vmatprep.subr.mxu0 0.0
    %655 = vmatpush1.xpose.msra.mxu0 %v652
    %656 = vmatprep.subr.mxu0 0.0
    %657 = vmatpush1.xpose.msra.mxu0 0.0
    %658 = vmatprep.subr.mxu0 0.0
    %659 = vmatpush1.xpose.msra.mxu0 0.0
    %660 = vmatprep.subr.mxu0 0.0
    %661 = vmatpush1.xpose.msra.mxu0 0.0
    %662 = vmatprep.subr.mxu0 0.0
    %663 = vmatpush1.xpose.msra.mxu0 0.0
    %664 = vmatprep.subr.mxu0 0.0
    %665 = vmatpush1.xpose.msra.mxu0 0.0
    %666 = vmatprep.subr.mxu0 0.0
    %667 = vmatpush1.xpose.msra.mxu0 0.0
    %668 = vmatprep.subr.mxu0 0.0
    %669 = vmatpush1.xpose.msra.mxu0 0.0
    %670 = vmatprep.subr.mxu0 0.0
    %671 = vmatpush1.xpose.msra.mxu0 0.0
    %672 = vmatprep.subr.mxu0 0.0
    %673 = vmatpush1.xpose.msra.mxu0 0.0
    %674 = vmatprep.subr.mxu0 0.0
    %675 = vmatpush1.xpose.msra.mxu0 0.0
    %676 = vmatprep.subr.mxu0 0.0
    %677 = vmatpush1.xpose.msra.mxu0 0.0
    %678 = vmatprep.subr.mxu0 0.0
    %679 = vmatpush1.xpose.msra.mxu0 0.0
    %680 = vmatprep.subr.mxu0 0.0
    %681 = vmatpush1.xpose.msra.mxu0 0.0
    %682 = vmatprep.subr.mxu0 0.0
    %683 = vmatpush1.xpose.msra.mxu0 0.0
    %684 = vmatprep.subr.mxu0 0.0
    %685 = vmatpush1.xpose.msra.mxu0 0.0
    %686 = vmatprep.subr.mxu0 0.0
    %687 = vmatpush1.xpose.msra.mxu0 0.0
    %688 = vmatprep.subr.mxu0 0.0
    %689 = vmatpush1.xpose.msra.mxu0 0.0
    %690 = vmatprep.subr.mxu0 0.0
    %691 = vmatpush1.xpose.msra.mxu0 0.0
    %692 = vmatprep.subr.mxu0 0.0
    %693 = vmatpush1.xpose.msra.mxu0 0.0
    %694 = vmatprep.subr.mxu0 0.0
    %695 = vmatpush1.xpose.msra.mxu0 0.0
    %696 = vmatprep.subr.mxu0 0.0
    %697 = vmatpush1.xpose.msra.mxu0 0.0
    %698 = vmatprep.subr.mxu0 0.0
    %699 = vmatpush1.xpose.msra.mxu0 0.0
    %700 = vmatprep.subr.mxu0 0.0
    %701 = vmatpush1.xpose.msra.mxu0 0.0
    %702 = vmatprep.subr.mxu0 0.0
    %703 = vmatpush1.xpose.msra.mxu0 0.0
    %704 = vmatprep.subr.mxu0 0.0
    %705 = vmatpush1.xpose.msra.mxu0 0.0
    %706 = vmatprep.subr.mxu0 0.0
    %707 = vmatpush1.xpose.msra.mxu0 0.0
    %708 = vmatprep.subr.mxu0 0.0
    %709 = vmatpush1.xpose.msra.mxu0 0.0
    %710 = vmatprep.subr.mxu0 0.0
    %711 = vmatpush1.xpose.msra.mxu0 0.0
    %712 = vmatprep.subr.mxu0 0.0
    %713 = vmatpush1.xpose.msra.mxu0 0.0
    %714 = vmatprep.subr.mxu0 0.0
    %715 = vmatpush1.xpose.msra.mxu0 0.0
    %716 = vmatprep.subr.mxu0 0.0
    %717 = vmatpush1.xpose.msra.mxu0 0.0
    %718 = vmatprep.mubr.f32.mxu0 0.0
    %719 = vmatmul.mubr.f32.gmra.mrb[0].mxu0 %v650
    %v720 = vpop.f32.mrb[0].mxu0
    %v721 = vadd.f32 %v162, %v720
    %v722 = vpop.f32.mrb[0].mxu0
    %723 = vdwg.mxu0
    %v724 = vsel %vm172, %v721, -inf
    %725 = vmax.xlane.f32.xlu0 %v724
    %v726 = vpop.xlane.xlu0 %725
    %v727 = vsub.f32 %v721, %v726
    %v728 = vmul.f32 %v727, 1.442695
    %v729 = vpow.pop %v728
    %v730 = vsel %vm172, %v729, 0.0
    %731 = vadd.xlane.f32.xlu0 %v730
    %v732 = vpop.xlane.xlu0 %731
    %v733 = vrcp.pop %v732
    %v734 = vmul.f32 %v729, %v733
    %735 = vrot.lane.b32.xlu0 %v149, 48
    %v736 = vpop.permute.xlu0 %735
    %v739 = vsel %vm172, %v734, 0
    %741 = vmatprep.subr.mxu0 0.0
    %742 = vmatpush1.msra.mxu0 %v736
    %743 = vmatprep.subr.mxu0 0.0
    %744 = vmatpush1.msra.mxu0 0.0
    %745 = vmatprep.subr.mxu0 0.0
    %746 = vmatpush1.msra.mxu0 0.0
    %747 = vmatprep.subr.mxu0 0.0
    %748 = vmatpush1.msra.mxu0 0.0
    %749 = vmatprep.subr.mxu0 0.0
    %750 = vmatpush1.msra.mxu0 0.0
    %751 = vmatprep.subr.mxu0 0.0
    %752 = vmatpush1.msra.mxu0 0.0
    %753 = vmatprep.subr.mxu0 0.0
    %754 = vmatpush1.msra.mxu0 0.0
    %755 = vmatprep.subr.mxu0 0.0
    %756 = vmatpush1.msra.mxu0 0.0
    %757 = vmatprep.subr.mxu0 0.0
    %758 = vmatpush1.msra.mxu0 0.0
    %759 = vmatprep.subr.mxu0 0.0
    %760 = vmatpush1.msra.mxu0 0.0
    %761 = vmatprep.subr.mxu0 0.0
    %762 = vmatpush1.msra.mxu0 0.0
    %763 = vmatprep.subr.mxu0 0.0
    %764 = vmatpush1.msra.mxu0 0.0
    %765 = vmatprep.subr.mxu0 0.0
    %766 = vmatpush1.msra.mxu0 0.0
    %767 = vmatprep.subr.mxu0 0.0
    %768 = vmatpush1.msra.mxu0 0.0
    %769 = vmatprep.subr.mxu0 0.0
    %770 = vmatpush1.msra.mxu0 0.0
    %771 = vmatprep.subr.mxu0 0.0
    %772 = vmatpush1.msra.mxu0 0.0
    %773 = vmatprep.subr.mxu0 0.0
    %774 = vmatpush1.msra.mxu0 0.0
    %775 = vmatprep.subr.mxu0 0.0
    %776 = vmatpush1.msra.mxu0 0.0
    %777 = vmatprep.subr.mxu0 0.0
    %778 = vmatpush1.msra.mxu0 0.0
    %779 = vmatprep.subr.mxu0 0.0
    %780 = vmatpush1.msra.mxu0 0.0
    %781 = vmatprep.subr.mxu0 0.0
    %782 = vmatpush1.msra.mxu0 0.0
    %783 = vmatprep.subr.mxu0 0.0
    %784 = vmatpush1.msra.mxu0 0.0
    %785 = vmatprep.subr.mxu0 0.0
    %786 = vmatpush1.msra.mxu0 0.0
    %787 = vmatprep.subr.mxu0 0.0
    %788 = vmatpush1.msra.mxu0 0.0
    %789 = vmatprep.subr.mxu0 0.0
    %790 = vmatpush1.msra.mxu0 0.0
    %791 = vmatprep.subr.mxu0 0.0
    %792 = vmatpush1.msra.mxu0 0.0
    %793 = vmatprep.subr.mxu0 0.0
    %794 = vmatpush1.msra.mxu0 0.0
    %795 = vmatprep.subr.mxu0 0.0
    %796 = vmatpush1.msra.mxu0 0.0
    %797 = vmatprep.subr.mxu0 0.0
    %798 = vmatpush1.msra.mxu0 0.0
    %799 = vmatprep.subr.mxu0 0.0
    %800 = vmatpush1.msra.mxu0 0.0
    %801 = vmatprep.subr.mxu0 0.0
    %802 = vmatpush1.msra.mxu0 0.0
    %803 = vmatprep.subr.mxu0 0.0
    %804 = vmatpush1.msra.mxu0 0.0
    %805 = vmatprep.mubr.f32.mxu0 0.0
    %806 = vmatmul.mubr.f32.gmra.mrb[0].mxu0 %v739
    %v807 = vpop.f32.mrb[0].mxu0
    %v808 = vadd.f32 0.0, %v807
    %v809 = vpop.f32.mrb[0].mxu0
    %810 = vdwg.mxu0
    %v812 = vsel %vm172, %v808, 0
    %814 = vmatprep.subr.mxu0 0.0
    %815 = vmatpush1.msra.mxu0 %v165
    %816 = vmatprep.subr.mxu0 0.0
    %817 = vmatpush1.msra.mxu0 0.0
    %818 = vmatprep.subr.mxu0 0.0
    %819 = vmatpush1.msra.mxu0 0.0
    %820 = vmatprep.subr.mxu0 0.0
    %821 = vmatpush1.msra.mxu0 0.0
    %822 = vmatprep.subr.mxu0 0.0
    %823 = vmatpush1.msra.mxu0 0.0
    %824 = vmatprep.subr.mxu0 0.0
    %825 = vmatpush1.msra.mxu0 0.0
    %826 = vmatprep.subr.mxu0 0.0
    %827 = vmatpush1.msra.mxu0 0.0
    %828 = vmatprep.subr.mxu0 0.0
    %829 = vmatpush1.msra.mxu0 0.0
    %830 = vmatprep.subr.mxu0 0.0
    %831 = vmatpush1.msra.mxu0 0.0
    %832 = vmatprep.subr.mxu0 0.0
    %833 = vmatpush1.msra.mxu0 0.0
    %834 = vmatprep.subr.mxu0 0.0
    %835 = vmatpush1.msra.mxu0 0.0
    %836 = vmatprep.subr.mxu0 0.0
    %837 = vmatpush1.msra.mxu0 0.0
    %838 = vmatprep.subr.mxu0 0.0
    %839 = vmatpush1.msra.mxu0 0.0
    %840 = vmatprep.subr.mxu0 0.0
    %841 = vmatpush1.msra.mxu0 0.0
    %842 = vmatprep.subr.mxu0 0.0
    %843 = vmatpush1.msra.mxu0 0.0
    %844 = vmatprep.subr.mxu0 0.0
    %845 = vmatpush1.msra.mxu0 0.0
    %846 = vmatprep.subr.mxu0 0.0
    %847 = vmatpush1.msra.mxu0 0.0
    %848 = vmatprep.subr.mxu0 0.0
    %849 = vmatpush1.msra.mxu0 0.0
    %850 = vmatprep.subr.mxu0 0.0
    %851 = vmatpush1.msra.mxu0 0.0
    %852 = vmatprep.subr.mxu0 0.0
    %853 = vmatpush1.msra.mxu0 0.0
    %854 = vmatprep.subr.mxu0 0.0
    %855 = vmatpush1.msra.mxu0 0.0
    %856 = vmatprep.subr.mxu0 0.0
    %857 = vmatpush1.msra.mxu0 0.0
    %858 = vmatprep.subr.mxu0 0.0
    %859 = vmatpush1.msra.mxu0 0.0
    %860 = vmatprep.subr.mxu0 0.0
    %861 = vmatpush1.msra.mxu0 0.0
    %862 = vmatprep.subr.mxu0 0.0
    %863 = vmatpush1.msra.mxu0 0.0
    %864 = vmatprep.subr.mxu0 0.0
    %865 = vmatpush1.msra.mxu0 0.0
    %866 = vmatprep.subr.mxu0 0.0
    %867 = vmatpush1.msra.mxu0 0.0
    %868 = vmatprep.subr.mxu0 0.0
    %869 = vmatpush1.msra.mxu0 0.0
    %870 = vmatprep.subr.mxu0 0.0
    %871 = vmatpush1.msra.mxu0 0.0
    %872 = vmatprep.subr.mxu0 0.0
    %873 = vmatpush1.msra.mxu0 0.0
    %874 = vmatprep.subr.mxu0 0.0
    %875 = vmatpush1.msra.mxu0 0.0
    %876 = vmatprep.subr.mxu0 0.0
    %877 = vmatpush1.msra.mxu0 0.0
    %878 = vmatprep.mubr.f32.mxu0 0.0
    %879 = vmatmul.mubr.f32.gmra.mrb[0].mxu0 %v812
    %v880 = vpop.f32.mrb[0].mxu0
    %v881 = vadd.f32 0.0, %v880
    %v882 = vpop.f32.mrb[0].mxu0
    %883 = vdwg.mxu0
    %v884 = vadd.f32 %v643, %v881
    %885 = vrot.lane.b32.xlu0 %v168, 104
    %v886 = vpop.permute.xlu0 %885
    %887 = vrot.lane.b32.xlu0 %v149, 72
    %v888 = vpop.permute.xlu0 %887
    %v889 = vsel %vm172, %v886, 0
    %v891 = vsel %vm172, %v888, 0
    %893 = vmatprep.subr.mxu0 0.0
    %894 = vmatpush1.xpose.msra.mxu0 %v891
    %895 = vmatprep.subr.mxu0 0.0
    %896 = vmatpush1.xpose.msra.mxu0 0.0
    %897 = vmatprep.subr.mxu0 0.0
    %898 = vmatpush1.xpose.msra.mxu0 0.0
    %899 = vmatprep.subr.mxu0 0.0
    %900 = vmatpush1.xpose.msra.mxu0 0.0
    %901 = vmatprep.subr.mxu0 0.0
    %902 = vmatpush1.xpose.msra.mxu0 0.0
    %903 = vmatprep.subr.mxu0 0.0
    %904 = vmatpush1.xpose.msra.mxu0 0.0
    %905 = vmatprep.subr.mxu0 0.0
    %906 = vmatpush1.xpose.msra.mxu0 0.0
    %907 = vmatprep.subr.mxu0 0.0
    %908 = vmatpush1.xpose.msra.mxu0 0.0
    %909 = vmatprep.subr.mxu0 0.0
    %910 = vmatpush1.xpose.msra.mxu0 0.0
    %911 = vmatprep.subr.mxu0 0.0
    %912 = vmatpush1.xpose.msra.mxu0 0.0
    %913 = vmatprep.subr.mxu0 0.0
    %914 = vmatpush1.xpose.msra.mxu0 0.0
    %915 = vmatprep.subr.mxu0 0.0
    %916 = vmatpush1.xpose.msra.mxu0 0.0
    %917 = vmatprep.subr.mxu0 0.0
    %918 = vmatpush1.xpose.msra.mxu0 0.0
    %919 = vmatprep.subr.mxu0 0.0
    %920 = vmatpush1.xpose.msra.mxu0 0.0
    %921 = vmatprep.subr.mxu0 0.0
    %922 = vmatpush1.xpose.msra.mxu0 0.0
    %923 = vmatprep.subr.mxu0 0.0
    %924 = vmatpush1.xpose.msra.mxu0 0.0
    %925 = vmatprep.subr.mxu0 0.0
    %926 = vmatpush1.xpose.msra.mxu0 0.0
    %927 = vmatprep.subr.mxu0 0.0
    %928 = vmatpush1.xpose.msra.mxu0 0.0
    %929 = vmatprep.subr.mxu0 0.0
    %930 = vmatpush1.xpose.msra.mxu0 0.0
    %931 = vmatprep.subr.mxu0 0.0
    %932 = vmatpush1.xpose.msra.mxu0 0.0
    %933 = vmatprep.subr.mxu0 0.0
    %934 = vmatpush1.xpose.msra.mxu0 0.0
    %935 = vmatprep.subr.mxu0 0.0
    %936 = vmatpush1.xpose.msra.mxu0 0.0
    %937 = vmatprep.subr.mxu0 0.0
    %938 = vmatpush1.xpose.msra.mxu0 0.0
    %939 = vmatprep.subr.mxu0 0.0
    %940 = vmatpush1.xpose.msra.mxu0 0.0
    %941 = vmatprep.subr.mxu0 0.0
    %942 = vmatpush1.xpose.msra.mxu0 0.0
    %943 = vmatprep.subr.mxu0 0.0
    %944 = vmatpush1.xpose.msra.mxu0 0.0
    %945 = vmatprep.subr.mxu0 0.0
    %946 = vmatpush1.xpose.msra.mxu0 0.0
    %947 = vmatprep.subr.mxu0 0.0
    %948 = vmatpush1.xpose.msra.mxu0 0.0
    %949 = vmatprep.subr.mxu0 0.0
    %950 = vmatpush1.xpose.msra.mxu0 0.0
    %951 = vmatprep.subr.mxu0 0.0
    %952 = vmatpush1.xpose.msra.mxu0 0.0
    %953 = vmatprep.subr.mxu0 0.0
    %954 = vmatpush1.xpose.msra.mxu0 0.0
    %955 = vmatprep.subr.mxu0 0.0
    %956 = vmatpush1.xpose.msra.mxu0 0.0
    %957 = vmatprep.mubr.f32.mxu0 0.0
    %958 = vmatmul.mubr.f32.gmra.mrb[0].mxu0 %v889
    %v959 = vpop.f32.mrb[0].mxu0
    %v960 = vadd.f32 %v162, %v959
    %v961 = vpop.f32.mrb[0].mxu0
    %962 = vdwg.mxu0
    %v963 = vsel %vm172, %v960, -inf
    %964 = vmax.xlane.f32.xlu0 %v963
    %v965 = vpop.xlane.xlu0 %964
    %v966 = vsub.f32 %v960, %v965
    %v967 = vmul.f32 %v966, 1.442695
    %v968 = vpow.pop %v967
    %v969 = vsel %vm172, %v968, 0.0
    %970 = vadd.xlane.f32.xlu0 %v969
    %v971 = vpop.xlane.xlu0 %970
    %v972 = vrcp.pop %v971
    %v973 = vmul.f32 %v968, %v972
    %974 = vrot.lane.b32.xlu0 %v149, 40
    %v975 = vpop.permute.xlu0 %974
    %v978 = vsel %vm172, %v973, 0
    %980 = vmatprep.subr.mxu0 0.0
    %981 = vmatpush1.msra.mxu0 %v975
    %982 = vmatprep.subr.mxu0 0.0
    %983 = vmatpush1.msra.mxu0 0.0
    %984 = vmatprep.subr.mxu0 0.0
    %985 = vmatpush1.msra.mxu0 0.0
    %986 = vmatprep.subr.mxu0 0.0
    %987 = vmatpush1.msra.mxu0 0.0
    %988 = vmatprep.subr.mxu0 0.0
    %989 = vmatpush1.msra.mxu0 0.0
    %990 = vmatprep.subr.mxu0 0.0
    %991 = vmatpush1.msra.mxu0 0.0
    %992 = vmatprep.subr.mxu0 0.0
    %993 = vmatpush1.msra.mxu0 0.0
    %994 = vmatprep.subr.mxu0 0.0
    %995 = vmatpush1.msra.mxu0 0.0
    %996 = vmatprep.subr.mxu0 0.0
    %997 = vmatpush1.msra.mxu0 0.0
    %998 = vmatprep.subr.mxu0 0.0
    %999 = vmatpush1.msra.mxu0 0.0
    %1000 = vmatprep.subr.mxu0 0.0
    %1001 = vmatpush1.msra.mxu0 0.0
    %1002 = vmatprep.subr.mxu0 0.0
    %1003 = vmatpush1.msra.mxu0 0.0
    %1004 = vmatprep.subr.mxu0 0.0
    %1005 = vmatpush1.msra.mxu0 0.0
    %1006 = vmatprep.subr.mxu0 0.0
    %1007 = vmatpush1.msra.mxu0 0.0
    %1008 = vmatprep.subr.mxu0 0.0
    %1009 = vmatpush1.msra.mxu0 0.0
    %1010 = vmatprep.subr.mxu0 0.0
    %1011 = vmatpush1.msra.mxu0 0.0
    %1012 = vmatprep.subr.mxu0 0.0
    %1013 = vmatpush1.msra.mxu0 0.0
    %1014 = vmatprep.subr.mxu0 0.0
    %1015 = vmatpush1.msra.mxu0 0.0
    %1016 = vmatprep.subr.mxu0 0.0
    %1017 = vmatpush1.msra.mxu0 0.0
    %1018 = vmatprep.subr.mxu0 0.0
    %1019 = vmatpush1.msra.mxu0 0.0
    %1020 = vmatprep.subr.mxu0 0.0
    %1021 = vmatpush1.msra.mxu0 0.0
    %1022 = vmatprep.subr.mxu0 0.0
    %1023 = vmatpush1.msra.mxu0 0.0
    %1024 = vmatprep.subr.mxu0 0.0
    %1025 = vmatpush1.msra.mxu0 0.0
    %1026 = vmatprep.subr.mxu0 0.0
    %1027 = vmatpush1.msra.mxu0 0.0
    %1028 = vmatprep.subr.mxu0 0.0
    %1029 = vmatpush1.msra.mxu0 0.0
    %1030 = vmatprep.subr.mxu0 0.0
    %1031 = vmatpush1.msra.mxu0 0.0
    %1032 = vmatprep.subr.mxu0 0.0
    %1033 = vmatpush1.msra.mxu0 0.0
    %1034 = vmatprep.subr.mxu0 0.0
    %1035 = vmatpush1.msra.mxu0 0.0
    %1036 = vmatprep.subr.mxu0 0.0
    %1037 = vmatpush1.msra.mxu0 0.0
    %1038 = vmatprep.subr.mxu0 0.0
    %1039 = vmatpush1.msra.mxu0 0.0
    %1040 = vmatprep.subr.mxu0 0.0
    %1041 = vmatpush1.msra.mxu0 0.0
    %1042 = vmatprep.subr.mxu0 0.0
    %1043 = vmatpush1.msra.mxu0 0.0
    %1044 = vmatprep.mubr.f32.mxu0 0.0
    %1045 = vmatmul.mubr.f32.gmra.mrb[0].mxu0 %v978
    %v1046 = vpop.f32.mrb[0].mxu0
    %v1047 = vadd.f32 0.0, %v1046
    %v1048 = vpop.f32.mrb[0].mxu0
    %1049 = vdwg.mxu0
    %v1051 = vsel %vm172, %v1047, 0
    %1053 = vmatprep.subr.mxu0 0.0
    %1054 = vmatpush1.msra.mxu0 %v166
    %1055 = vmatprep.subr.mxu0 0.0
    %1056 = vmatpush1.msra.mxu0 0.0
    %1057 = vmatprep.subr.mxu0 0.0
    %1058 = vmatpush1.msra.mxu0 0.0
    %1059 = vmatprep.subr.mxu0 0.0
    %1060 = vmatpush1.msra.mxu0 0.0
    %1061 = vmatprep.subr.mxu0 0.0
    %1062 = vmatpush1.msra.mxu0 0.0
    %1063 = vmatprep.subr.mxu0 0.0
    %1064 = vmatpush1.msra.mxu0 0.0
    %1065 = vmatprep.subr.mxu0 0.0
    %1066 = vmatpush1.msra.mxu0 0.0
    %1067 = vmatprep.subr.mxu0 0.0
    %1068 = vmatpush1.msra.mxu0 0.0
    %1069 = vmatprep.subr.mxu0 0.0
    %1070 = vmatpush1.msra.mxu0 0.0
    %1071 = vmatprep.subr.mxu0 0.0
    %1072 = vmatpush1.msra.mxu0 0.0
    %1073 = vmatprep.subr.mxu0 0.0
    %1074 = vmatpush1.msra.mxu0 0.0
    %1075 = vmatprep.subr.mxu0 0.0
    %1076 = vmatpush1.msra.mxu0 0.0
    %1077 = vmatprep.subr.mxu0 0.0
    %1078 = vmatpush1.msra.mxu0 0.0
    %1079 = vmatprep.subr.mxu0 0.0
    %1080 = vmatpush1.msra.mxu0 0.0
    %1081 = vmatprep.subr.mxu0 0.0
    %1082 = vmatpush1.msra.mxu0 0.0
    %1083 = vmatprep.subr.mxu0 0.0
    %1084 = vmatpush1.msra.mxu0 0.0
    %1085 = vmatprep.subr.mxu0 0.0
    %1086 = vmatpush1.msra.mxu0 0.0
    %1087 = vmatprep.subr.mxu0 0.0
    %1088 = vmatpush1.msra.mxu0 0.0
    %1089 = vmatprep.subr.mxu0 0.0
    %1090 = vmatpush1.msra.mxu0 0.0
    %1091 = vmatprep.subr.mxu0 0.0
    %1092 = vmatpush1.msra.mxu0 0.0
    %1093 = vmatprep.subr.mxu0 0.0
    %1094 = vmatpush1.msra.mxu0 0.0
    %1095 = vmatprep.subr.mxu0 0.0
    %1096 = vmatpush1.msra.mxu0 0.0
    %1097 = vmatprep.subr.mxu0 0.0
    %1098 = vmatpush1.msra.mxu0 0.0
    %1099 = vmatprep.subr.mxu0 0.0
    %1100 = vmatpush1.msra.mxu0 0.0
    %1101 = vmatprep.subr.mxu0 0.0
    %1102 = vmatpush1.msra.mxu0 0.0
    %1103 = vmatprep.subr.mxu0 0.0
    %1104 = vmatpush1.msra.mxu0 0.0
    %1105 = vmatprep.subr.mxu0 0.0
    %1106 = vmatpush1.msra.mxu0 0.0
    %1107 = vmatprep.subr.mxu0 0.0
    %1108 = vmatpush1.msra.mxu0 0.0
    %1109 = vmatprep.subr.mxu0 0.0
    %1110 = vmatpush1.msra.mxu0 0.0
    %1111 = vmatprep.subr.mxu0 0.0
    %1112 = vmatpush1.msra.mxu0 0.0
    %1113 = vmatprep.subr.mxu0 0.0
    %1114 = vmatpush1.msra.mxu0 0.0
    %1115 = vmatprep.subr.mxu0 0.0
    %1116 = vmatpush1.msra.mxu0 0.0
    %1117 = vmatprep.mubr.f32.mxu0 0.0
    %1118 = vmatmul.mubr.f32.gmra.mrb[0].mxu0 %v1051
    %v1119 = vpop.f32.mrb[0].mxu0
    %v1120 = vadd.f32 0.0, %v1119
    %v1121 = vpop.f32.mrb[0].mxu0
    %1122 = vdwg.mxu0
    %v1123 = vadd.f32 %v884, %v1120
    %v1125 = vlaneseq
    %v1126 = vshrl.u32 %v1125, 7
    %v1127 = vsub.s32 0, %v1126
    %v1128 = vrot.slane %v167, %v1127
    %v1130 = vadd.f32 %v1123, %v1128
    %1131 = vst.msk [vmem:[#allocation8] sm:$0xff] %vm75, %v1130
    %v1132 = vmul.f32 %v154, 0.35355338
    %1134 = vrot.lane.b32.xlu0 %v154, 96
    %v1135 = vpop.permute.xlu0 %1134
    %v1137 = vsel %vm172, %v1132, 0
    %v1139 = vsel %vm172, %v1135, 0
    %1141 = vmatprep.subr.mxu0 0.0
    %1142 = vmatpush1.xpose.msra.mxu0 %v1139
    %1143 = vmatprep.subr.mxu0 0.0
    %1144 = vmatpush1.xpose.msra.mxu0 0.0
    %1145 = vmatprep.subr.mxu0 0.0
    %1146 = vmatpush1.xpose.msra.mxu0 0.0
    %1147 = vmatprep.subr.mxu0 0.0
    %1148 = vmatpush1.xpose.msra.mxu0 0.0
    %1149 = vmatprep.subr.mxu0 0.0
    %1150 = vmatpush1.xpose.msra.mxu0 0.0
    %1151 = vmatprep.subr.mxu0 0.0
    %1152 = vmatpush1.xpose.msra.mxu0 0.0
    %1153 = vmatprep.subr.mxu0 0.0
    %1154 = vmatpush1.xpose.msra.mxu0 0.0
    %1155 = vmatprep.subr.mxu0 0.0
    %1156 = vmatpush1.xpose.msra.mxu0 0.0
    %1157 = vmatprep.subr.mxu0 0.0
    %1158 = vmatpush1.xpose.msra.mxu0 0.0
    %1159 = vmatprep.subr.mxu0 0.0
    %1160 = vmatpush1.xpose.msra.mxu0 0.0
    %1161 = vmatprep.subr.mxu0 0.0
    %1162 = vmatpush1.xpose.msra.mxu0 0.0
    %1163 = vmatprep.subr.mxu0 0.0
    %1164 = vmatpush1.xpose.msra.mxu0 0.0
    %1165 = vmatprep.subr.mxu0 0.0
    %1166 = vmatpush1.xpose.msra.mxu0 0.0
    %1167 = vmatprep.subr.mxu0 0.0
    %1168 = vmatpush1.xpose.msra.mxu0 0.0
    %1169 = vmatprep.subr.mxu0 0.0
    %1170 = vmatpush1.xpose.msra.mxu0 0.0
    %1171 = vmatprep.subr.mxu0 0.0
    %1172 = vmatpush1.xpose.msra.mxu0 0.0
    %1173 = vmatprep.subr.mxu0 0.0
    %1174 = vmatpush1.xpose.msra.mxu0 0.0
    %1175 = vmatprep.subr.mxu0 0.0
    %1176 = vmatpush1.xpose.msra.mxu0 0.0
    %1177 = vmatprep.subr.mxu0 0.0
    %1178 = vmatpush1.xpose.msra.mxu0 0.0
    %1179 = vmatprep.subr.mxu0 0.0
    %1180 = vmatpush1.xpose.msra.mxu0 0.0
    %1181 = vmatprep.subr.mxu0 0.0
    %1182 = vmatpush1.xpose.msra.mxu0 0.0
    %1183 = vmatprep.subr.mxu0 0.0
    %1184 = vmatpush1.xpose.msra.mxu0 0.0
    %1185 = vmatprep.subr.mxu0 0.0
    %1186 = vmatpush1.xpose.msra.mxu0 0.0
    %1187 = vmatprep.subr.mxu0 0.0
    %1188 = vmatpush1.xpose.msra.mxu0 0.0
    %1189 = vmatprep.subr.mxu0 0.0
    %1190 = vmatpush1.xpose.msra.mxu0 0.0
    %1191 = vmatprep.subr.mxu0 0.0
    %1192 = vmatpush1.xpose.msra.mxu0 0.0
    %1193 = vmatprep.subr.mxu0 0.0
    %1194 = vmatpush1.xpose.msra.mxu0 0.0
    %1195 = vmatprep.subr.mxu0 0.0
    %1196 = vmatpush1.xpose.msra.mxu0 0.0
    %1197 = vmatprep.subr.mxu0 0.0
    %1198 = vmatpush1.xpose.msra.mxu0 0.0
    %1199 = vmatprep.subr.mxu0 0.0
    %1200 = vmatpush1.xpose.msra.mxu0 0.0
    %1201 = vmatprep.subr.mxu0 0.0
    %1202 = vmatpush1.xpose.msra.mxu0 0.0
    %1203 = vmatprep.subr.mxu0 0.0
    %1204 = vmatpush1.xpose.msra.mxu0 0.0
    %1205 = vmatprep.mubr.f32.mxu0 0.0
    %1206 = vmatmul.mubr.f32.gmra.mrb[0].mxu0 %v1137
    %v1207 = vpop.f32.mrb[0].mxu0
    %v1208 = vadd.f32 %v162, %v1207
    %v1209 = vpop.f32.mrb[0].mxu0
    %1210 = vdwg.mxu0
    %v1211 = vsel %vm172, %v1208, -inf
    %1212 = vmax.xlane.f32.xlu0 %v1211
    %v1213 = vpop.xlane.xlu0 %1212
    %v1214 = vsub.f32 %v1208, %v1213
    %v1215 = vmul.f32 %v1214, 1.442695
    %v1216 = vpow.pop %v1215
    %v1217 = vsel %vm172, %v1216, 0.0
    %1218 = vadd.xlane.f32.xlu0 %v1217
    %v1219 = vpop.xlane.xlu0 %1218
    %v1220 = vrcp.pop %v1219
    %v1221 = vmul.f32 %v1216, %v1220
    %1222 = vrot.lane.b32.xlu0 %v154, 64
    %v1223 = vpop.permute.xlu0 %1222
    %v1226 = vsel %vm172, %v1221, 0
    %1228 = vmatprep.subr.mxu0 0.0
    %1229 = vmatpush1.msra.mxu0 %v1223
    %1230 = vmatprep.subr.mxu0 0.0
    %1231 = vmatpush1.msra.mxu0 0.0
    %1232 = vmatprep.subr.mxu0 0.0
    %1233 = vmatpush1.msra.mxu0 0.0
    %1234 = vmatprep.subr.mxu0 0.0
    %1235 = vmatpush1.msra.mxu0 0.0
    %1236 = vmatprep.subr.mxu0 0.0
    %1237 = vmatpush1.msra.mxu0 0.0
    %1238 = vmatprep.subr.mxu0 0.0
    %1239 = vmatpush1.msra.mxu0 0.0
    %1240 = vmatprep.subr.mxu0 0.0
    %1241 = vmatpush1.msra.mxu0 0.0
    %1242 = vmatprep.subr.mxu0 0.0
    %1243 = vmatpush1.msra.mxu0 0.0
    %1244 = vmatprep.subr.mxu0 0.0
    %1245 = vmatpush1.msra.mxu0 0.0
    %1246 = vmatprep.subr.mxu0 0.0
    %1247 = vmatpush1.msra.mxu0 0.0
    %1248 = vmatprep.subr.mxu0 0.0
    %1249 = vmatpush1.msra.mxu0 0.0
    %1250 = vmatprep.subr.mxu0 0.0
    %1251 = vmatpush1.msra.mxu0 0.0
    %1252 = vmatprep.subr.mxu0 0.0
    %1253 = vmatpush1.msra.mxu0 0.0
    %1254 = vmatprep.subr.mxu0 0.0
    %1255 = vmatpush1.msra.mxu0 0.0
    %1256 = vmatprep.subr.mxu0 0.0
    %1257 = vmatpush1.msra.mxu0 0.0
    %1258 = vmatprep.subr.mxu0 0.0
    %1259 = vmatpush1.msra.mxu0 0.0
    %1260 = vmatprep.subr.mxu0 0.0
    %1261 = vmatpush1.msra.mxu0 0.0
    %1262 = vmatprep.subr.mxu0 0.0
    %1263 = vmatpush1.msra.mxu0 0.0
    %1264 = vmatprep.subr.mxu0 0.0
    %1265 = vmatpush1.msra.mxu0 0.0
    %1266 = vmatprep.subr.mxu0 0.0
    %1267 = vmatpush1.msra.mxu0 0.0
    %1268 = vmatprep.subr.mxu0 0.0
    %1269 = vmatpush1.msra.mxu0 0.0
    %1270 = vmatprep.subr.mxu0 0.0
    %1271 = vmatpush1.msra.mxu0 0.0
    %1272 = vmatprep.subr.mxu0 0.0
    %1273 = vmatpush1.msra.mxu0 0.0
    %1274 = vmatprep.subr.mxu0 0.0
    %1275 = vmatpush1.msra.mxu0 0.0
    %1276 = vmatprep.subr.mxu0 0.0
    %1277 = vmatpush1.msra.mxu0 0.0
    %1278 = vmatprep.subr.mxu0 0.0
    %1279 = vmatpush1.msra.mxu0 0.0
    %1280 = vmatprep.subr.mxu0 0.0
    %1281 = vmatpush1.msra.mxu0 0.0
    %1282 = vmatprep.subr.mxu0 0.0
    %1283 = vmatpush1.msra.mxu0 0.0
    %1284 = vmatprep.subr.mxu0 0.0
    %1285 = vmatpush1.msra.mxu0 0.0
    %1286 = vmatprep.subr.mxu0 0.0
    %1287 = vmatpush1.msra.mxu0 0.0
    %1288 = vmatprep.subr.mxu0 0.0
    %1289 = vmatpush1.msra.mxu0 0.0
    %1290 = vmatprep.subr.mxu0 0.0
    %1291 = vmatpush1.msra.mxu0 0.0
    %1292 = vmatprep.mubr.f32.mxu0 0.0
    %1293 = vmatmul.mubr.f32.gmra.mrb[0].mxu0 %v1226
    %v1294 = vpop.f32.mrb[0].mxu0
    %v1295 = vadd.f32 0.0, %v1294
    %v1296 = vpop.f32.mrb[0].mxu0
    %1297 = vdwg.mxu0
    %1298 = vrot.lane.b32.xlu0 %v1132, 120
    %v1299 = vpop.permute.xlu0 %1298
    %1300 = vrot.lane.b32.xlu0 %v154, 88
    %v1301 = vpop.permute.xlu0 %1300
    %v1302 = vsel %vm172, %v1299, 0
    %v1304 = vsel %vm172, %v1301, 0
    %1306 = vmatprep.subr.mxu0 0.0
    %1307 = vmatpush1.xpose.msra.mxu0 %v1304
    %1308 = vmatprep.subr.mxu0 0.0
    %1309 = vmatpush1.xpose.msra.mxu0 0.0
    %1310 = vmatprep.subr.mxu0 0.0
    %1311 = vmatpush1.xpose.msra.mxu0 0.0
    %1312 = vmatprep.subr.mxu0 0.0
    %1313 = vmatpush1.xpose.msra.mxu0 0.0
    %1314 = vmatprep.subr.mxu0 0.0
    %1315 = vmatpush1.xpose.msra.mxu0 0.0
    %1316 = vmatprep.subr.mxu0 0.0
    %1317 = vmatpush1.xpose.msra.mxu0 0.0
    %1318 = vmatprep.subr.mxu0 0.0
    %1319 = vmatpush1.xpose.msra.mxu0 0.0
    %1320 = vmatprep.subr.mxu0 0.0
    %1321 = vmatpush1.xpose.msra.mxu0 0.0
    %1322 = vmatprep.subr.mxu0 0.0
    %1323 = vmatpush1.xpose.msra.mxu0 0.0
    %1324 = vmatprep.subr.mxu0 0.0
    %1325 = vmatpush1.xpose.msra.mxu0 0.0
    %1326 = vmatprep.subr.mxu0 0.0
    %1327 = vmatpush1.xpose.msra.mxu0 0.0
    %1328 = vmatprep.subr.mxu0 0.0
    %1329 = vmatpush1.xpose.msra.mxu0 0.0
    %1330 = vmatprep.subr.mxu0 0.0
    %1331 = vmatpush1.xpose.msra.mxu0 0.0
    %1332 = vmatprep.subr.mxu0 0.0
    %1333 = vmatpush1.xpose.msra.mxu0 0.0
    %1334 = vmatprep.subr.mxu0 0.0
    %1335 = vmatpush1.xpose.msra.mxu0 0.0
    %1336 = vmatprep.subr.mxu0 0.0
    %1337 = vmatpush1.xpose.msra.mxu0 0.0
    %1338 = vmatprep.subr.mxu0 0.0
    %1339 = vmatpush1.xpose.msra.mxu0 0.0
    %1340 = vmatprep.subr.mxu0 0.0
    %1341 = vmatpush1.xpose.msra.mxu0 0.0
    %1342 = vmatprep.subr.mxu0 0.0
    %1343 = vmatpush1.xpose.msra.mxu0 0.0
    %1344 = vmatprep.subr.mxu0 0.0
    %1345 = vmatpush1.xpose.msra.mxu0 0.0
    %1346 = vmatprep.subr.mxu0 0.0
    %1347 = vmatpush1.xpose.msra.mxu0 0.0
    %1348 = vmatprep.subr.mxu0 0.0
    %1349 = vmatpush1.xpose.msra.mxu0 0.0
    %1350 = vmatprep.subr.mxu0 0.0
    %1351 = vmatpush1.xpose.msra.mxu0 0.0
    %1352 = vmatprep.subr.mxu0 0.0
    %1353 = vmatpush1.xpose.msra.mxu0 0.0
    %1354 = vmatprep.subr.mxu0 0.0
    %1355 = vmatpush1.xpose.msra.mxu0 0.0
    %1356 = vmatprep.subr.mxu0 0.0
    %1357 = vmatpush1.xpose.msra.mxu0 0.0
    %1358 = vmatprep.subr.mxu0 0.0
    %1359 = vmatpush1.xpose.msra.mxu0 0.0
    %1360 = vmatprep.subr.mxu0 0.0
    %1361 = vmatpush1.xpose.msra.mxu0 0.0
    %1362 = vmatprep.subr.mxu0 0.0
    %1363 = vmatpush1.xpose.msra.mxu0 0.0
    %1364 = vmatprep.subr.mxu0 0.0
    %1365 = vmatpush1.xpose.msra.mxu0 0.0
    %1366 = vmatprep.subr.mxu0 0.0
    %1367 = vmatpush1.xpose.msra.mxu0 0.0
    %1368 = vmatprep.subr.mxu0 0.0
    %1369 = vmatpush1.xpose.msra.mxu0 0.0
    %1370 = vmatprep.mubr.f32.mxu0 0.0
    %1371 = vmatmul.mubr.f32.gmra.mrb[0].mxu0 %v1302
    %v1372 = vpop.f32.mrb[0].mxu0
    %v1373 = vadd.f32 %v162, %v1372
    %v1374 = vpop.f32.mrb[0].mxu0
    %1375 = vdwg.mxu0
    %v1376 = vsel %vm172, %v1373, -inf
    %1377 = vmax.xlane.f32.xlu0 %v1376
    %v1378 = vpop.xlane.xlu0 %1377
    %v1379 = vsub.f32 %v1373, %v1378
    %v1380 = vmul.f32 %v1379, 1.442695
    %v1381 = vpow.pop %v1380
    %v1382 = vsel %vm172, %v1381, 0.0
    %1383 = vadd.xlane.f32.xlu0 %v1382
    %v1384 = vpop.xlane.xlu0 %1383
    %v1385 = vrcp.pop %v1384
    %v1386 = vmul.f32 %v1381, %v1385
    %1387 = vrot.lane.b32.xlu0 %v154, 56
    %v1388 = vpop.permute.xlu0 %1387
    %v1391 = vsel %vm172, %v1386, 0
    %1393 = vmatprep.subr.mxu0 0.0
    %1394 = vmatpush1.msra.mxu0 %v1388
    %1395 = vmatprep.subr.mxu0 0.0
    %1396 = vmatpush1.msra.mxu0 0.0
    %1397 = vmatprep.subr.mxu0 0.0
    %1398 = vmatpush1.msra.mxu0 0.0
    %1399 = vmatprep.subr.mxu0 0.0
    %1400 = vmatpush1.msra.mxu0 0.0
    %1401 = vmatprep.subr.mxu0 0.0
    %1402 = vmatpush1.msra.mxu0 0.0
    %1403 = vmatprep.subr.mxu0 0.0
    %1404 = vmatpush1.msra.mxu0 0.0
    %1405 = vmatprep.subr.mxu0 0.0
    %1406 = vmatpush1.msra.mxu0 0.0
    %1407 = vmatprep.subr.mxu0 0.0
    %1408 = vmatpush1.msra.mxu0 0.0
    %1409 = vmatprep.subr.mxu0 0.0
    %1410 = vmatpush1.msra.mxu0 0.0
    %1411 = vmatprep.subr.mxu0 0.0
    %1412 = vmatpush1.msra.mxu0 0.0
    %1413 = vmatprep.subr.mxu0 0.0
    %1414 = vmatpush1.msra.mxu0 0.0
    %1415 = vmatprep.subr.mxu0 0.0
    %1416 = vmatpush1.msra.mxu0 0.0
    %1417 = vmatprep.subr.mxu0 0.0
    %1418 = vmatpush1.msra.mxu0 0.0
    %1419 = vmatprep.subr.mxu0 0.0
    %1420 = vmatpush1.msra.mxu0 0.0
    %1421 = vmatprep.subr.mxu0 0.0
    %1422 = vmatpush1.msra.mxu0 0.0
    %1423 = vmatprep.subr.mxu0 0.0
    %1424 = vmatpush1.msra.mxu0 0.0
    %1425 = vmatprep.subr.mxu0 0.0
    %1426 = vmatpush1.msra.mxu0 0.0
    %1427 = vmatprep.subr.mxu0 0.0
    %1428 = vmatpush1.msra.mxu0 0.0
    %1429 = vmatprep.subr.mxu0 0.0
    %1430 = vmatpush1.msra.mxu0 0.0
    %1431 = vmatprep.subr.mxu0 0.0
    %1432 = vmatpush1.msra.mxu0 0.0
    %1433 = vmatprep.subr.mxu0 0.0
    %1434 = vmatpush1.msra.mxu0 0.0
    %1435 = vmatprep.subr.mxu0 0.0
    %1436 = vmatpush1.msra.mxu0 0.0
    %1437 = vmatprep.subr.mxu0 0.0
    %1438 = vmatpush1.msra.mxu0 0.0
    %1439 = vmatprep.subr.mxu0 0.0
    %1440 = vmatpush1.msra.mxu0 0.0
    %1441 = vmatprep.subr.mxu0 0.0
    %1442 = vmatpush1.msra.mxu0 0.0
    %1443 = vmatprep.subr.mxu0 0.0
    %1444 = vmatpush1.msra.mxu0 0.0
    %1445 = vmatprep.subr.mxu0 0.0
    %1446 = vmatpush1.msra.mxu0 0.0
    %1447 = vmatprep.subr.mxu0 0.0
    %1448 = vmatpush1.msra.mxu0 0.0
    %1449 = vmatprep.subr.mxu0 0.0
    %1450 = vmatpush1.msra.mxu0 0.0
    %1451 = vmatprep.subr.mxu0 0.0
    %1452 = vmatpush1.msra.mxu0 0.0
    %1453 = vmatprep.subr.mxu0 0.0
    %1454 = vmatpush1.msra.mxu0 0.0
    %1455 = vmatprep.subr.mxu0 0.0
    %1456 = vmatpush1.msra.mxu0 0.0
    %1457 = vmatprep.mubr.f32.mxu0 0.0
    %1458 = vmatmul.mubr.f32.gmra.mrb[0].mxu0 %v1391
    %v1459 = vpop.f32.mrb[0].mxu0
    %v1460 = vadd.f32 0.0, %v1459
    %v1461 = vpop.f32.mrb[0].mxu0
    %1462 = vdwg.mxu0
    %v1464 = vsel %vm172, %v1460, 0
    %1466 = vmatprep.subr.mxu0 0.0
    %1467 = vmatpush1.msra.mxu0 %v164
    %1468 = vmatprep.subr.mxu0 0.0
    %1469 = vmatpush1.msra.mxu0 0.0
    %1470 = vmatprep.subr.mxu0 0.0
    %1471 = vmatpush1.msra.mxu0 0.0
    %1472 = vmatprep.subr.mxu0 0.0
    %1473 = vmatpush1.msra.mxu0 0.0
    %1474 = vmatprep.subr.mxu0 0.0
    %1475 = vmatpush1.msra.mxu0 0.0
    %1476 = vmatprep.subr.mxu0 0.0
    %1477 = vmatpush1.msra.mxu0 0.0
    %1478 = vmatprep.subr.mxu0 0.0
    %1479 = vmatpush1.msra.mxu0 0.0
    %1480 = vmatprep.subr.mxu0 0.0
    %1481 = vmatpush1.msra.mxu0 0.0
    %1482 = vmatprep.subr.mxu0 0.0
    %1483 = vmatpush1.msra.mxu0 0.0
    %1484 = vmatprep.subr.mxu0 0.0
    %1485 = vmatpush1.msra.mxu0 0.0
    %1486 = vmatprep.subr.mxu0 0.0
    %1487 = vmatpush1.msra.mxu0 0.0
    %1488 = vmatprep.subr.mxu0 0.0
    %1489 = vmatpush1.msra.mxu0 0.0
    %1490 = vmatprep.subr.mxu0 0.0
    %1491 = vmatpush1.msra.mxu0 0.0
    %1492 = vmatprep.subr.mxu0 0.0
    %1493 = vmatpush1.msra.mxu0 0.0
    %1494 = vmatprep.subr.mxu0 0.0
    %1495 = vmatpush1.msra.mxu0 0.0
    %1496 = vmatprep.subr.mxu0 0.0
    %1497 = vmatpush1.msra.mxu0 0.0
    %1498 = vmatprep.subr.mxu0 0.0
    %1499 = vmatpush1.msra.mxu0 0.0
    %1500 = vmatprep.subr.mxu0 0.0
    %1501 = vmatpush1.msra.mxu0 0.0
    %1502 = vmatprep.subr.mxu0 0.0
    %1503 = vmatpush1.msra.mxu0 0.0
    %1504 = vmatprep.subr.mxu0 0.0
    %1505 = vmatpush1.msra.mxu0 0.0
    %1506 = vmatprep.subr.mxu0 0.0
    %1507 = vmatpush1.msra.mxu0 0.0
    %1508 = vmatprep.subr.mxu0 0.0
    %1509 = vmatpush1.msra.mxu0 0.0
    %1510 = vmatprep.subr.mxu0 0.0
    %1511 = vmatpush1.msra.mxu0 0.0
    %1512 = vmatprep.subr.mxu0 0.0
    %1513 = vmatpush1.msra.mxu0 0.0
    %1514 = vmatprep.subr.mxu0 0.0
    %1515 = vmatpush1.msra.mxu0 0.0
    %1516 = vmatprep.subr.mxu0 0.0
    %1517 = vmatpush1.msra.mxu0 0.0
    %1518 = vmatprep.subr.mxu0 0.0
    %1519 = vmatpush1.msra.mxu0 0.0
    %1520 = vmatprep.subr.mxu0 0.0
    %1521 = vmatpush1.msra.mxu0 0.0
    %1522 = vmatprep.subr.mxu0 0.0
    %1523 = vmatpush1.msra.mxu0 0.0
    %1524 = vmatprep.subr.mxu0 0.0
    %1525 = vmatpush1.msra.mxu0 0.0
    %1526 = vmatprep.subr.mxu0 0.0
    %1527 = vmatpush1.msra.mxu0 0.0
    %1528 = vmatprep.subr.mxu0 0.0
    %1529 = vmatpush1.msra.mxu0 0.0
    %1530 = vmatprep.mubr.f32.mxu0 0.0
    %1531 = vmatmul.mubr.f32.gmra.mrb[0].mxu0 %v1464
    %v1532 = vpop.f32.mrb[0].mxu0
    %v1533 = vadd.f32 0.0, %v1532
    %v1534 = vpop.f32.mrb[0].mxu0
    %1535 = vdwg.mxu0
    %v1537 = vsel %vm172, %v1295, 0
    %1539 = vmatprep.subr.mxu0 0.0
    %1540 = vmatpush1.msra.mxu0 %v163
    %1541 = vmatprep.subr.mxu0 0.0
    %1542 = vmatpush1.msra.mxu0 0.0
    %1543 = vmatprep.subr.mxu0 0.0
    %1544 = vmatpush1.msra.mxu0 0.0
    %1545 = vmatprep.subr.mxu0 0.0
    %1546 = vmatpush1.msra.mxu0 0.0
    %1547 = vmatprep.subr.mxu0 0.0
    %1548 = vmatpush1.msra.mxu0 0.0
    %1549 = vmatprep.subr.mxu0 0.0
    %1550 = vmatpush1.msra.mxu0 0.0
    %1551 = vmatprep.subr.mxu0 0.0
    %1552 = vmatpush1.msra.mxu0 0.0
    %1553 = vmatprep.subr.mxu0 0.0
    %1554 = vmatpush1.msra.mxu0 0.0
    %1555 = vmatprep.subr.mxu0 0.0
    %1556 = vmatpush1.msra.mxu0 0.0
    %1557 = vmatprep.subr.mxu0 0.0
    %1558 = vmatpush1.msra.mxu0 0.0
    %1559 = vmatprep.subr.mxu0 0.0
    %1560 = vmatpush1.msra.mxu0 0.0
    %1561 = vmatprep.subr.mxu0 0.0
    %1562 = vmatpush1.msra.mxu0 0.0
    %1563 = vmatprep.subr.mxu0 0.0
    %1564 = vmatpush1.msra.mxu0 0.0
    %1565 = vmatprep.subr.mxu0 0.0
    %1566 = vmatpush1.msra.mxu0 0.0
    %1567 = vmatprep.subr.mxu0 0.0
    %1568 = vmatpush1.msra.mxu0 0.0
    %1569 = vmatprep.subr.mxu0 0.0
    %1570 = vmatpush1.msra.mxu0 0.0
    %1571 = vmatprep.subr.mxu0 0.0
    %1572 = vmatpush1.msra.mxu0 0.0
    %1573 = vmatprep.subr.mxu0 0.0
    %1574 = vmatpush1.msra.mxu0 0.0
    %1575 = vmatprep.subr.mxu0 0.0
    %1576 = vmatpush1.msra.mxu0 0.0
    %1577 = vmatprep.subr.mxu0 0.0
    %1578 = vmatpush1.msra.mxu0 0.0
    %1579 = vmatprep.subr.mxu0 0.0
    %1580 = vmatpush1.msra.mxu0 0.0
    %1581 = vmatprep.subr.mxu0 0.0
    %1582 = vmatpush1.msra.mxu0 0.0
    %1583 = vmatprep.subr.mxu0 0.0
    %1584 = vmatpush1.msra.mxu0 0.0
    %1585 = vmatprep.subr.mxu0 0.0
    %1586 = vmatpush1.msra.mxu0 0.0
    %1587 = vmatprep.subr.mxu0 0.0
    %1588 = vmatpush1.msra.mxu0 0.0
    %1589 = vmatprep.subr.mxu0 0.0
    %1590 = vmatpush1.msra.mxu0 0.0
    %1591 = vmatprep.subr.mxu0 0.0
    %1592 = vmatpush1.msra.mxu0 0.0
    %1593 = vmatprep.subr.mxu0 0.0
    %1594 = vmatpush1.msra.mxu0 0.0
    %1595 = vmatprep.subr.mxu0 0.0
    %1596 = vmatpush1.msra.mxu0 0.0
    %1597 = vmatprep.subr.mxu0 0.0
    %1598 = vmatpush1.msra.mxu0 0.0
    %1599 = vmatprep.subr.mxu0 0.0
    %1600 = vmatpush1.msra.mxu0 0.0
    %1601 = vmatprep.subr.mxu0 0.0
    %1602 = vmatpush1.msra.mxu0 0.0
    %1603 = vmatprep.mubr.f32.mxu0 0.0
    %1604 = vmatmul.mubr.f32.gmra.mrb[0].mxu0 %v1537
    %v1605 = vpop.f32.mrb[0].mxu0
    %v1606 = vadd.f32 %v1533, %v1605
    %v1607 = vpop.f32.mrb[0].mxu0
    %1608 = vdwg.mxu0
    %1609 = vrot.lane.b32.xlu0 %v1132, 112
    %v1610 = vpop.permute.xlu0 %1609
    %1611 = vrot.lane.b32.xlu0 %v154, 80
    %v1612 = vpop.permute.xlu0 %1611
    %v1613 = vsel %vm172, %v1610, 0
    %v1615 = vsel %vm172, %v1612, 0
    %1617 = vmatprep.subr.mxu0 0.0
    %1618 = vmatpush1.xpose.msra.mxu0 %v1615
    %1619 = vmatprep.subr.mxu0 0.0
    %1620 = vmatpush1.xpose.msra.mxu0 0.0
    %1621 = vmatprep.subr.mxu0 0.0
    %1622 = vmatpush1.xpose.msra.mxu0 0.0
    %1623 = vmatprep.subr.mxu0 0.0
    %1624 = vmatpush1.xpose.msra.mxu0 0.0
    %1625 = vmatprep.subr.mxu0 0.0
    %1626 = vmatpush1.xpose.msra.mxu0 0.0
    %1627 = vmatprep.subr.mxu0 0.0
    %1628 = vmatpush1.xpose.msra.mxu0 0.0
    %1629 = vmatprep.subr.mxu0 0.0
    %1630 = vmatpush1.xpose.msra.mxu0 0.0
    %1631 = vmatprep.subr.mxu0 0.0
    %1632 = vmatpush1.xpose.msra.mxu0 0.0
    %1633 = vmatprep.subr.mxu0 0.0
    %1634 = vmatpush1.xpose.msra.mxu0 0.0
    %1635 = vmatprep.subr.mxu0 0.0
    %1636 = vmatpush1.xpose.msra.mxu0 0.0
    %1637 = vmatprep.subr.mxu0 0.0
    %1638 = vmatpush1.xpose.msra.mxu0 0.0
    %1639 = vmatprep.subr.mxu0 0.0
    %1640 = vmatpush1.xpose.msra.mxu0 0.0
    %1641 = vmatprep.subr.mxu0 0.0
    %1642 = vmatpush1.xpose.msra.mxu0 0.0
    %1643 = vmatprep.subr.mxu0 0.0
    %1644 = vmatpush1.xpose.msra.mxu0 0.0
    %1645 = vmatprep.subr.mxu0 0.0
    %1646 = vmatpush1.xpose.msra.mxu0 0.0
    %1647 = vmatprep.subr.mxu0 0.0
    %1648 = vmatpush1.xpose.msra.mxu0 0.0
    %1649 = vmatprep.subr.mxu0 0.0
    %1650 = vmatpush1.xpose.msra.mxu0 0.0
    %1651 = vmatprep.subr.mxu0 0.0
    %1652 = vmatpush1.xpose.msra.mxu0 0.0
    %1653 = vmatprep.subr.mxu0 0.0
    %1654 = vmatpush1.xpose.msra.mxu0 0.0
    %1655 = vmatprep.subr.mxu0 0.0
    %1656 = vmatpush1.xpose.msra.mxu0 0.0
    %1657 = vmatprep.subr.mxu0 0.0
    %1658 = vmatpush1.xpose.msra.mxu0 0.0
    %1659 = vmatprep.subr.mxu0 0.0
    %1660 = vmatpush1.xpose.msra.mxu0 0.0
    %1661 = vmatprep.subr.mxu0 0.0
    %1662 = vmatpush1.xpose.msra.mxu0 0.0
    %1663 = vmatprep.subr.mxu0 0.0
    %1664 = vmatpush1.xpose.msra.mxu0 0.0
    %1665 = vmatprep.subr.mxu0 0.0
    %1666 = vmatpush1.xpose.msra.mxu0 0.0
    %1667 = vmatprep.subr.mxu0 0.0
    %1668 = vmatpush1.xpose.msra.mxu0 0.0
    %1669 = vmatprep.subr.mxu0 0.0
    %1670 = vmatpush1.xpose.msra.mxu0 0.0
    %1671 = vmatprep.subr.mxu0 0.0
    %1672 = vmatpush1.xpose.msra.mxu0 0.0
    %1673 = vmatprep.subr.mxu0 0.0
    %1674 = vmatpush1.xpose.msra.mxu0 0.0
    %1675 = vmatprep.subr.mxu0 0.0
    %1676 = vmatpush1.xpose.msra.mxu0 0.0
    %1677 = vmatprep.subr.mxu0 0.0
    %1678 = vmatpush1.xpose.msra.mxu0 0.0
    %1679 = vmatprep.subr.mxu0 0.0
    %1680 = vmatpush1.xpose.msra.mxu0 0.0
    %1681 = vmatprep.mubr.f32.mxu0 0.0
    %1682 = vmatmul.mubr.f32.gmra.mrb[0].mxu0 %v1613
    %v1683 = vpop.f32.mrb[0].mxu0
    %v1684 = vadd.f32 %v162, %v1683
    %v1685 = vpop.f32.mrb[0].mxu0
    %1686 = vdwg.mxu0
    %v1687 = vsel %vm172, %v1684, -inf
    %1688 = vmax.xlane.f32.xlu0 %v1687
    %v1689 = vpop.xlane.xlu0 %1688
    %v1690 = vsub.f32 %v1684, %v1689
    %v1691 = vmul.f32 %v1690, 1.442695
    %v1692 = vpow.pop %v1691
    %v1693 = vsel %vm172, %v1692, 0.0
    %1694 = vadd.xlane.f32.xlu0 %v1693
    %v1695 = vpop.xlane.xlu0 %1694
    %v1696 = vrcp.pop %v1695
    %v1697 = vmul.f32 %v1692, %v1696
    %1698 = vrot.lane.b32.xlu0 %v154, 48
    %v1699 = vpop.permute.xlu0 %1698
    %v1702 = vsel %vm172, %v1697, 0
    %1704 = vmatprep.subr.mxu0 0.0
    %1705 = vmatpush1.msra.mxu0 %v1699
    %1706 = vmatprep.subr.mxu0 0.0
    %1707 = vmatpush1.msra.mxu0 0.0
    %1708 = vmatprep.subr.mxu0 0.0
    %1709 = vmatpush1.msra.mxu0 0.0
    %1710 = vmatprep.subr.mxu0 0.0
    %1711 = vmatpush1.msra.mxu0 0.0
    %1712 = vmatprep.subr.mxu0 0.0
    %1713 = vmatpush1.msra.mxu0 0.0
    %1714 = vmatprep.subr.mxu0 0.0
    %1715 = vmatpush1.msra.mxu0 0.0
    %1716 = vmatprep.subr.mxu0 0.0
    %1717 = vmatpush1.msra.mxu0 0.0
    %1718 = vmatprep.subr.mxu0 0.0
    %1719 = vmatpush1.msra.mxu0 0.0
    %1720 = vmatprep.subr.mxu0 0.0
    %1721 = vmatpush1.msra.mxu0 0.0
    %1722 = vmatprep.subr.mxu0 0.0
    %1723 = vmatpush1.msra.mxu0 0.0
    %1724 = vmatprep.subr.mxu0 0.0
    %1725 = vmatpush1.msra.mxu0 0.0
    %1726 = vmatprep.subr.mxu0 0.0
    %1727 = vmatpush1.msra.mxu0 0.0
    %1728 = vmatprep.subr.mxu0 0.0
    %1729 = vmatpush1.msra.mxu0 0.0
    %1730 = vmatprep.subr.mxu0 0.0
    %1731 = vmatpush1.msra.mxu0 0.0
    %1732 = vmatprep.subr.mxu0 0.0
    %1733 = vmatpush1.msra.mxu0 0.0
    %1734 = vmatprep.subr.mxu0 0.0
    %1735 = vmatpush1.msra.mxu0 0.0
    %1736 = vmatprep.subr.mxu0 0.0
    %1737 = vmatpush1.msra.mxu0 0.0
    %1738 = vmatprep.subr.mxu0 0.0
    %1739 = vmatpush1.msra.mxu0 0.0
    %1740 = vmatprep.subr.mxu0 0.0
    %1741 = vmatpush1.msra.mxu0 0.0
    %1742 = vmatprep.subr.mxu0 0.0
    %1743 = vmatpush1.msra.mxu0 0.0
    %1744 = vmatprep.subr.mxu0 0.0
    %1745 = vmatpush1.msra.mxu0 0.0
    %1746 = vmatprep.subr.mxu0 0.0
    %1747 = vmatpush1.msra.mxu0 0.0
    %1748 = vmatprep.subr.mxu0 0.0
    %1749 = vmatpush1.msra.mxu0 0.0
    %1750 = vmatprep.subr.mxu0 0.0
    %1751 = vmatpush1.msra.mxu0 0.0
    %1752 = vmatprep.subr.mxu0 0.0
    %1753 = vmatpush1.msra.mxu0 0.0
    %1754 = vmatprep.subr.mxu0 0.0
    %1755 = vmatpush1.msra.mxu0 0.0
    %1756 = vmatprep.subr.mxu0 0.0
    %1757 = vmatpush1.msra.mxu0 0.0
    %1758 = vmatprep.subr.mxu0 0.0
    %1759 = vmatpush1.msra.mxu0 0.0
    %1760 = vmatprep.subr.mxu0 0.0
    %1761 = vmatpush1.msra.mxu0 0.0
    %1762 = vmatprep.subr.mxu0 0.0
    %1763 = vmatpush1.msra.mxu0 0.0
    %1764 = vmatprep.subr.mxu0 0.0
    %1765 = vmatpush1.msra.mxu0 0.0
    %1766 = vmatprep.subr.mxu0 0.0
    %1767 = vmatpush1.msra.mxu0 0.0
    %1768 = vmatprep.mubr.f32.mxu0 0.0
    %1769 = vmatmul.mubr.f32.gmra.mrb[0].mxu0 %v1702
    %v1770 = vpop.f32.mrb[0].mxu0
    %v1771 = vadd.f32 0.0, %v1770
    %v1772 = vpop.f32.mrb[0].mxu0
    %1773 = vdwg.mxu0
    %v1775 = vsel %vm172, %v1771, 0
    %1777 = vmatprep.subr.mxu0 0.0
    %1778 = vmatpush1.msra.mxu0 %v165
    %1779 = vmatprep.subr.mxu0 0.0
    %1780 = vmatpush1.msra.mxu0 0.0
    %1781 = vmatprep.subr.mxu0 0.0
    %1782 = vmatpush1.msra.mxu0 0.0
    %1783 = vmatprep.subr.mxu0 0.0
    %1784 = vmatpush1.msra.mxu0 0.0
    %1785 = vmatprep.subr.mxu0 0.0
    %1786 = vmatpush1.msra.mxu0 0.0
    %1787 = vmatprep.subr.mxu0 0.0
    %1788 = vmatpush1.msra.mxu0 0.0
    %1789 = vmatprep.subr.mxu0 0.0
    %1790 = vmatpush1.msra.mxu0 0.0
    %1791 = vmatprep.subr.mxu0 0.0
    %1792 = vmatpush1.msra.mxu0 0.0
    %1793 = vmatprep.subr.mxu0 0.0
    %1794 = vmatpush1.msra.mxu0 0.0
    %1795 = vmatprep.subr.mxu0 0.0
    %1796 = vmatpush1.msra.mxu0 0.0
    %1797 = vmatprep.subr.mxu0 0.0
    %1798 = vmatpush1.msra.mxu0 0.0
    %1799 = vmatprep.subr.mxu0 0.0
    %1800 = vmatpush1.msra.mxu0 0.0
    %1801 = vmatprep.subr.mxu0 0.0
    %1802 = vmatpush1.msra.mxu0 0.0
    %1803 = vmatprep.subr.mxu0 0.0
    %1804 = vmatpush1.msra.mxu0 0.0
    %1805 = vmatprep.subr.mxu0 0.0
    %1806 = vmatpush1.msra.mxu0 0.0
    %1807 = vmatprep.subr.mxu0 0.0
    %1808 = vmatpush1.msra.mxu0 0.0
    %1809 = vmatprep.subr.mxu0 0.0
    %1810 = vmatpush1.msra.mxu0 0.0
    %1811 = vmatprep.subr.mxu0 0.0
    %1812 = vmatpush1.msra.mxu0 0.0
    %1813 = vmatprep.subr.mxu0 0.0
    %1814 = vmatpush1.msra.mxu0 0.0
    %1815 = vmatprep.subr.mxu0 0.0
    %1816 = vmatpush1.msra.mxu0 0.0
    %1817 = vmatprep.subr.mxu0 0.0
    %1818 = vmatpush1.msra.mxu0 0.0
    %1819 = vmatprep.subr.mxu0 0.0
    %1820 = vmatpush1.msra.mxu0 0.0
    %1821 = vmatprep.subr.mxu0 0.0
    %1822 = vmatpush1.msra.mxu0 0.0
    %1823 = vmatprep.subr.mxu0 0.0
    %1824 = vmatpush1.msra.mxu0 0.0
    %1825 = vmatprep.subr.mxu0 0.0
    %1826 = vmatpush1.msra.mxu0 0.0
    %1827 = vmatprep.subr.mxu0 0.0
    %1828 = vmatpush1.msra.mxu0 0.0
    %1829 = vmatprep.subr.mxu0 0.0
    %1830 = vmatpush1.msra.mxu0 0.0
    %1831 = vmatprep.subr.mxu0 0.0
    %1832 = vmatpush1.msra.mxu0 0.0
    %1833 = vmatprep.subr.mxu0 0.0
    %1834 = vmatpush1.msra.mxu0 0.0
    %1835 = vmatprep.subr.mxu0 0.0
    %1836 = vmatpush1.msra.mxu0 0.0
    %1837 = vmatprep.subr.mxu0 0.0
    %1838 = vmatpush1.msra.mxu0 0.0
    %1839 = vmatprep.subr.mxu0 0.0
    %1840 = vmatpush1.msra.mxu0 0.0
    %1841 = vmatprep.mubr.f32.mxu0 0.0
    %1842 = vmatmul.mubr.f32.gmra.mrb[0].mxu0 %v1775
    %v1843 = vpop.f32.mrb[0].mxu0
    %v1844 = vadd.f32 0.0, %v1843
    %v1845 = vpop.f32.mrb[0].mxu0
    %1846 = vdwg.mxu0
    %v1847 = vadd.f32 %v1606, %v1844
    %1848 = vrot.lane.b32.xlu0 %v1132, 104
    %v1849 = vpop.permute.xlu0 %1848
    %1850 = vrot.lane.b32.xlu0 %v154, 72
    %v1851 = vpop.permute.xlu0 %1850
    %v1852 = vsel %vm172, %v1849, 0
    %v1854 = vsel %vm172, %v1851, 0
    %1856 = vmatprep.subr.mxu0 0.0
    %1857 = vmatpush1.xpose.msra.mxu0 %v1854
    %1858 = vmatprep.subr.mxu0 0.0
    %1859 = vmatpush1.xpose.msra.mxu0 0.0
    %1860 = vmatprep.subr.mxu0 0.0
    %1861 = vmatpush1.xpose.msra.mxu0 0.0
    %1862 = vmatprep.subr.mxu0 0.0
    %1863 = vmatpush1.xpose.msra.mxu0 0.0
    %1864 = vmatprep.subr.mxu0 0.0
    %1865 = vmatpush1.xpose.msra.mxu0 0.0
    %1866 = vmatprep.subr.mxu0 0.0
    %1867 = vmatpush1.xpose.msra.mxu0 0.0
    %1868 = vmatprep.subr.mxu0 0.0
    %1869 = vmatpush1.xpose.msra.mxu0 0.0
    %1870 = vmatprep.subr.mxu0 0.0
    %1871 = vmatpush1.xpose.msra.mxu0 0.0
    %1872 = vmatprep.subr.mxu0 0.0
    %1873 = vmatpush1.xpose.msra.mxu0 0.0
    %1874 = vmatprep.subr.mxu0 0.0
    %1875 = vmatpush1.xpose.msra.mxu0 0.0
    %1876 = vmatprep.subr.mxu0 0.0
    %1877 = vmatpush1.xpose.msra.mxu0 0.0
    %1878 = vmatprep.subr.mxu0 0.0
    %1879 = vmatpush1.xpose.msra.mxu0 0.0
    %1880 = vmatprep.subr.mxu0 0.0
    %1881 = vmatpush1.xpose.msra.mxu0 0.0
    %1882 = vmatprep.subr.mxu0 0.0
    %1883 = vmatpush1.xpose.msra.mxu0 0.0
    %1884 = vmatprep.subr.mxu0 0.0
    %1885 = vmatpush1.xpose.msra.mxu0 0.0
    %1886 = vmatprep.subr.mxu0 0.0
    %1887 = vmatpush1.xpose.msra.mxu0 0.0
    %1888 = vmatprep.subr.mxu0 0.0
    %1889 = vmatpush1.xpose.msra.mxu0 0.0
    %1890 = vmatprep.subr.mxu0 0.0
    %1891 = vmatpush1.xpose.msra.mxu0 0.0
    %1892 = vmatprep.subr.mxu0 0.0
    %1893 = vmatpush1.xpose.msra.mxu0 0.0
    %1894 = vmatprep.subr.mxu0 0.0
    %1895 = vmatpush1.xpose.msra.mxu0 0.0
    %1896 = vmatprep.subr.mxu0 0.0
    %1897 = vmatpush1.xpose.msra.mxu0 0.0
    %1898 = vmatprep.subr.mxu0 0.0
    %1899 = vmatpush1.xpose.msra.mxu0 0.0
    %1900 = vmatprep.subr.mxu0 0.0
    %1901 = vmatpush1.xpose.msra.mxu0 0.0
    %1902 = vmatprep.subr.mxu0 0.0
    %1903 = vmatpush1.xpose.msra.mxu0 0.0
    %1904 = vmatprep.subr.mxu0 0.0
    %1905 = vmatpush1.xpose.msra.mxu0 0.0
    %1906 = vmatprep.subr.mxu0 0.0
    %1907 = vmatpush1.xpose.msra.mxu0 0.0
    %1908 = vmatprep.subr.mxu0 0.0
    %1909 = vmatpush1.xpose.msra.mxu0 0.0
    %1910 = vmatprep.subr.mxu0 0.0
    %1911 = vmatpush1.xpose.msra.mxu0 0.0
    %1912 = vmatprep.subr.mxu0 0.0
    %1913 = vmatpush1.xpose.msra.mxu0 0.0
    %1914 = vmatprep.subr.mxu0 0.0
    %1915 = vmatpush1.xpose.msra.mxu0 0.0
    %1916 = vmatprep.subr.mxu0 0.0
    %1917 = vmatpush1.xpose.msra.mxu0 0.0
    %1918 = vmatprep.subr.mxu0 0.0
    %1919 = vmatpush1.xpose.msra.mxu0 0.0
    %1920 = vmatprep.mubr.f32.mxu0 0.0
    %1921 = vmatmul.mubr.f32.gmra.mrb[0].mxu0 %v1852
    %v1922 = vpop.f32.mrb[0].mxu0
    %v1923 = vadd.f32 %v162, %v1922
    %v1924 = vpop.f32.mrb[0].mxu0
    %1925 = vdwg.mxu0
    %v1926 = vsel %vm172, %v1923, -inf
    %1927 = vmax.xlane.f32.xlu0 %v1926
    %v1928 = vpop.xlane.xlu0 %1927
    %v1929 = vsub.f32 %v1923, %v1928
    %v1930 = vmul.f32 %v1929, 1.442695
    %v1931 = vpow.pop %v1930
    %v1932 = vsel %vm172, %v1931, 0.0
    %1933 = vadd.xlane.f32.xlu0 %v1932
    %v1934 = vpop.xlane.xlu0 %1933
    %v1935 = vrcp.pop %v1934
    %v1936 = vmul.f32 %v1931, %v1935
    %1937 = vrot.lane.b32.xlu0 %v154, 40
    %v1938 = vpop.permute.xlu0 %1937
    %v1941 = vsel %vm172, %v1936, 0
    %1943 = vmatprep.subr.mxu0 0.0
    %1944 = vmatpush1.msra.mxu0 %v1938
    %1945 = vmatprep.subr.mxu0 0.0
    %1946 = vmatpush1.msra.mxu0 0.0
    %1947 = vmatprep.subr.mxu0 0.0
    %1948 = vmatpush1.msra.mxu0 0.0
    %1949 = vmatprep.subr.mxu0 0.0
    %1950 = vmatpush1.msra.mxu0 0.0
    %1951 = vmatprep.subr.mxu0 0.0
    %1952 = vmatpush1.msra.mxu0 0.0
    %1953 = vmatprep.subr.mxu0 0.0
    %1954 = vmatpush1.msra.mxu0 0.0
    %1955 = vmatprep.subr.mxu0 0.0
    %1956 = vmatpush1.msra.mxu0 0.0
    %1957 = vmatprep.subr.mxu0 0.0
    %1958 = vmatpush1.msra.mxu0 0.0
    %1959 = vmatprep.subr.mxu0 0.0
    %1960 = vmatpush1.msra.mxu0 0.0
    %1961 = vmatprep.subr.mxu0 0.0
    %1962 = vmatpush1.msra.mxu0 0.0
    %1963 = vmatprep.subr.mxu0 0.0
    %1964 = vmatpush1.msra.mxu0 0.0
    %1965 = vmatprep.subr.mxu0 0.0
    %1966 = vmatpush1.msra.mxu0 0.0
    %1967 = vmatprep.subr.mxu0 0.0
    %1968 = vmatpush1.msra.mxu0 0.0
    %1969 = vmatprep.subr.mxu0 0.0
    %1970 = vmatpush1.msra.mxu0 0.0
    %1971 = vmatprep.subr.mxu0 0.0
    %1972 = vmatpush1.msra.mxu0 0.0
    %1973 = vmatprep.subr.mxu0 0.0
    %1974 = vmatpush1.msra.mxu0 0.0
    %1975 = vmatprep.subr.mxu0 0.0
    %1976 = vmatpush1.msra.mxu0 0.0
    %1977 = vmatprep.subr.mxu0 0.0
    %1978 = vmatpush1.msra.mxu0 0.0
    %1979 = vmatprep.subr.mxu0 0.0
    %1980 = vmatpush1.msra.mxu0 0.0
    %1981 = vmatprep.subr.mxu0 0.0
    %1982 = vmatpush1.msra.mxu0 0.0
    %1983 = vmatprep.subr.mxu0 0.0
    %1984 = vmatpush1.msra.mxu0 0.0
    %1985 = vmatprep.subr.mxu0 0.0
    %1986 = vmatpush1.msra.mxu0 0.0
    %1987 = vmatprep.subr.mxu0 0.0
    %1988 = vmatpush1.msra.mxu0 0.0
    %1989 = vmatprep.subr.mxu0 0.0
    %1990 = vmatpush1.msra.mxu0 0.0
    %1991 = vmatprep.subr.mxu0 0.0
    %1992 = vmatpush1.msra.mxu0 0.0
    %1993 = vmatprep.subr.mxu0 0.0
    %1994 = vmatpush1.msra.mxu0 0.0
    %1995 = vmatprep.subr.mxu0 0.0
    %1996 = vmatpush1.msra.mxu0 0.0
    %1997 = vmatprep.subr.mxu0 0.0
    %1998 = vmatpush1.msra.mxu0 0.0
    %1999 = vmatprep.subr.mxu0 0.0
    %2000 = vmatpush1.msra.mxu0 0.0
    %2001 = vmatprep.subr.mxu0 0.0
    %2002 = vmatpush1.msra.mxu0 0.0
    %2003 = vmatprep.subr.mxu0 0.0
    %2004 = vmatpush1.msra.mxu0 0.0
    %2005 = vmatprep.subr.mxu0 0.0
    %2006 = vmatpush1.msra.mxu0 0.0
    %2007 = vmatprep.mubr.f32.mxu0 0.0
    %2008 = vmatmul.mubr.f32.gmra.mrb[0].mxu0 %v1941
    %v2009 = vpop.f32.mrb[0].mxu0
    %v2010 = vadd.f32 0.0, %v2009
    %v2011 = vpop.f32.mrb[0].mxu0
    %2012 = vdwg.mxu0
    %v2014 = vsel %vm172, %v2010, 0
    %2016 = vmatprep.subr.mxu0 0.0
    %2017 = vmatpush1.msra.mxu0 %v166
    %2018 = vmatprep.subr.mxu0 0.0
    %2019 = vmatpush1.msra.mxu0 0.0
    %2020 = vmatprep.subr.mxu0 0.0
    %2021 = vmatpush1.msra.mxu0 0.0
    %2022 = vmatprep.subr.mxu0 0.0
    %2023 = vmatpush1.msra.mxu0 0.0
    %2024 = vmatprep.subr.mxu0 0.0
    %2025 = vmatpush1.msra.mxu0 0.0
    %2026 = vmatprep.subr.mxu0 0.0
    %2027 = vmatpush1.msra.mxu0 0.0
    %2028 = vmatprep.subr.mxu0 0.0
    %2029 = vmatpush1.msra.mxu0 0.0
    %2030 = vmatprep.subr.mxu0 0.0
    %2031 = vmatpush1.msra.mxu0 0.0
    %2032 = vmatprep.subr.mxu0 0.0
    %2033 = vmatpush1.msra.mxu0 0.0
    %2034 = vmatprep.subr.mxu0 0.0
    %2035 = vmatpush1.msra.mxu0 0.0
    %2036 = vmatprep.subr.mxu0 0.0
    %2037 = vmatpush1.msra.mxu0 0.0
    %2038 = vmatprep.subr.mxu0 0.0
    %2039 = vmatpush1.msra.mxu0 0.0
    %2040 = vmatprep.subr.mxu0 0.0
    %2041 = vmatpush1.msra.mxu0 0.0
    %2042 = vmatprep.subr.mxu0 0.0
    %2043 = vmatpush1.msra.mxu0 0.0
    %2044 = vmatprep.subr.mxu0 0.0
    %2045 = vmatpush1.msra.mxu0 0.0
    %2046 = vmatprep.subr.mxu0 0.0
    %2047 = vmatpush1.msra.mxu0 0.0
    %2048 = vmatprep.subr.mxu0 0.0
    %2049 = vmatpush1.msra.mxu0 0.0
    %2050 = vmatprep.subr.mxu0 0.0
    %2051 = vmatpush1.msra.mxu0 0.0
    %2052 = vmatprep.subr.mxu0 0.0
    %2053 = vmatpush1.msra.mxu0 0.0
    %2054 = vmatprep.subr.mxu0 0.0
    %2055 = vmatpush1.msra.mxu0 0.0
    %2056 = vmatprep.subr.mxu0 0.0
    %2057 = vmatpush1.msra.mxu0 0.0
    %2058 = vmatprep.subr.mxu0 0.0
    %2059 = vmatpush1.msra.mxu0 0.0
    %2060 = vmatprep.subr.mxu0 0.0
    %2061 = vmatpush1.msra.mxu0 0.0
    %2062 = vmatprep.subr.mxu0 0.0
    %2063 = vmatpush1.msra.mxu0 0.0
    %2064 = vmatprep.subr.mxu0 0.0
    %2065 = vmatpush1.msra.mxu0 0.0
    %2066 = vmatprep.subr.mxu0 0.0
    %2067 = vmatpush1.msra.mxu0 0.0
    %2068 = vmatprep.subr.mxu0 0.0
    %2069 = vmatpush1.msra.mxu0 0.0
    %2070 = vmatprep.subr.mxu0 0.0
    %2071 = vmatpush1.msra.mxu0 0.0
    %2072 = vmatprep.subr.mxu0 0.0
    %2073 = vmatpush1.msra.mxu0 0.0
    %2074 = vmatprep.subr.mxu0 0.0
    %2075 = vmatpush1.msra.mxu0 0.0
    %2076 = vmatprep.subr.mxu0 0.0
    %2077 = vmatpush1.msra.mxu0 0.0
    %2078 = vmatprep.subr.mxu0 0.0
    %2079 = vmatpush1.msra.mxu0 0.0
    %2080 = vmatprep.mubr.f32.mxu0 0.0
    %2081 = vmatmul.mubr.f32.gmra.mrb[0].mxu0 %v2014
    %v2082 = vpop.f32.mrb[0].mxu0
    %v2083 = vadd.f32 0.0, %v2082
    %v2084 = vpop.f32.mrb[0].mxu0
    %2085 = vdwg.mxu0
    %v2086 = vadd.f32 %v1847, %v2083
    %v2087 = vadd.f32 %v2086, %v1128
    %s2088 = scalar_lea.vmem [#allocation8], 8
    %2089 = vst.msk [vmem:[%s2088] sm:$0xff] %vm75, %v2087
    // Predicated region
    $region34: #{tpu_custom_call.1} parent=1 // pred_check
      _
    $region35: #{tpu_custom_call.1} parent=1 // pred_check_branch
      %2091 = sbr.rel (0) target = $region37
    $region36: #{tpu_custom_call.1} parent=1 // pred_region
      %s2093 = ssub.s32 256, 256
      %2094 = vsyncadd [#allocation4], %s2093
      %s2095 = sshll.u32 [#allocation8], 4
      %s2096 = int_to_ptr.vmem [resolvable:$true] %s2095
      %2101 = dma.vmem_to_hbm [thread:$0]  %s2096, 256, %s5, [#allocation4], 128, 128, 8
    $region37: #{tpu_custom_call.1} parent=1 // pred_fallthru
      _
    // Predicated region
    $region38: #{tpu_custom_call.1} parent=1 // pred_check
      _
    $region39: #{tpu_custom_call.1} parent=1 // pred_check_branch
      %2103 = sbr.rel (0) target = $region41
    $region40: #{tpu_custom_call.1} parent=1 // pred_region
      %2104 = dma.done [#allocation4], 256
    $region41: #{tpu_custom_call.1} parent=1 // pred_fallthru
      _
    %2105 = vsyncpa [#allocation3], 1
    %2106 = vsyncpa [#allocation6], 1
    %2107 = vsyncpa [#allocation4], 1

</llo_original>
